<compile_context>
chip_gen: v6e
topology: v6e:2x2x1
jax: 0.10.0
libtpu: 0.0.40
codegen_flags: <defaults>
</compile_context>

<pallas_src>
import math
from functools import partial

import jax
import jax.numpy as jnp
from jax.experimental import pallas as pl
from jax.experimental.pallas import tpu as pltpu

# Small hyperparameters consistent with the module structure.
NUM_HEADS = 4
D_MODEL = 32
D_K = D_MODEL // NUM_HEADS
SEQ_LEN = 8
BATCH = 2


def _mha_kernel(x_ref, wqkv_ref, bqkv_ref, wd_ref, bd_ref, o_ref, *,
                batch, seq_len, num_heads):
    """Whole-batch multi-head self-attention in one invocation.

    x_ref:    (B*S, D)   flattened input activations
    wqkv_ref: (D, 3D)    fused, pre-transposed (in, out) Q/K/V weights
    bqkv_ref: (1, 3D)    fused Q/K/V biases
    wd_ref:   (D, D)     pre-transposed (in, out) output-projection weight
    bd_ref:   (1, D)     output-projection bias
    o_ref:    (B*S, D)   output
    """
    B, S, H = batch, seq_len, num_heads
    D = wd_ref.shape[0]
    dk = D // H
    inv_sqrt_dk = 1.0 / math.sqrt(dk)

    x = x_ref[...]                                               # (B*S, D)

    # Fused Q/K/V projection: one (B*S, D) x (D, 3D) MXU contraction.
    qkv = (jnp.dot(x, wqkv_ref[...], preferred_element_type=jnp.float32)
           + bqkv_ref[...])                                      # (B*S, 3D)

    bd = bd_ref[...]                                             # (1, D)

    # Static unroll over batch and heads: all slices stay 2-D with static,
    # 8-aligned offsets; no reshapes / transposes / concats in-kernel.
    for b in range(B):
        r0 = b * S
        qkv_b = qkv[r0:r0 + S, :]                                # (S, 3D)
        out_b = jnp.zeros((S, D), jnp.float32)
        for h in range(H):
            c0 = h * dk
            qh = qkv_b[:, c0:c0 + dk]                            # (S, dk)
            kh = qkv_b[:, D + c0:D + c0 + dk]                    # (S, dk)
            vh = qkv_b[:, 2 * D + c0:2 * D + c0 + dk]            # (S, dk)

            # scores = q @ k^T / sqrt(dk): contraction on dk, no transpose op.
            s = jnp.einsum("qd,kd->qk", qh, kh,
                           preferred_element_type=jnp.float32) * inv_sqrt_dk
            s = s - jnp.max(s, axis=-1, keepdims=True)           # safe softmax
            e = jnp.exp(s)
            denom = jnp.sum(e, axis=-1, keepdims=True)
            p = e * pl.reciprocal(denom, approx=True)            # EUP recip

            ctx = jnp.dot(p, vh,
                          preferred_element_type=jnp.float32)    # (S, dk)

            # Fold the head-concat into the output projection: head h only
            # touches rows [c0, c0+dk) of the (in, out) dense weight.
            out_b = out_b + jnp.dot(ctx, wd_ref[c0:c0 + dk, :],
                                    preferred_element_type=jnp.float32)

        o_ref[r0:r0 + S, :] = (out_b + bd).astype(o_ref.dtype)


def multi_headed_attention(x, params, num_heads=NUM_HEADS):
    """x: (B, S, D) float32. Returns (B, S, D). Self-attention (q=k=v=x)."""
    B, S, D = x.shape

    # Wrapper-side layout plumbing (free for the kernel):
    # fuse Q/K/V and pre-transpose every weight to (in, out).
    wqkv_t = jnp.concatenate(
        [params["wq"], params["wk"], params["wv"]], axis=0).T    # (D, 3D)
    bqkv = jnp.concatenate(
        [params["bq"], params["bk"], params["bv"]], axis=1)      # (1, 3D)
    wd_t = params["wd"].T                                        # (D, D)
    bd = params["bd"]                                            # (1, D)

    x_flat = x.reshape(B * S, D)

    vmem = pl.BlockSpec(memory_space=pltpu.MemorySpace.VMEM)
    out_flat = pl.pallas_call(
        partial(_mha_kernel, batch=B, seq_len=S, num_heads=num_heads),
        out_shape=jax.ShapeDtypeStruct((B * S, D), x.dtype),
        in_specs=[vmem, vmem, vmem, vmem, vmem],
        out_specs=vmem,
    )(x_flat, wqkv_t, bqkv, wd_t, bd)

    return out_flat.reshape(B, S, D)


def _reference(x, params):
    """Pure-JAX reference of the PyTorch forward (dropout = identity)."""
    B, S, D = x.shape
    H, dk = NUM_HEADS, D_K

    def lin(t, w, b):
        return t @ w.T + b[0]

    q = lin(x, params["wq"], params["bq"]).reshape(B, S, H, dk).transpose(0, 2, 1, 3)
    k = lin(x, params["wk"], params["bk"]).reshape(B, S, H, dk).transpose(0, 2, 1, 3)
    v = lin(x, params["wv"], params["bv"]).reshape(B, S, H, dk).transpose(0, 2, 1, 3)
    scores = jnp.einsum("bhqd,bhkd->bhqk", q, k) / math.sqrt(dk)
    p = jax.nn.softmax(scores, axis=-1)
    ctx = jnp.einsum("bhqk,bhkd->bhqd", p, v).transpose(0, 2, 1, 3).reshape(B, S, D)
    return lin(ctx, params["wd"], params["bd"])


def init_params(key, d_model):
    keys = jax.random.split(key, 8)
    bound = 1.0 / math.sqrt(d_model)

    def w(k):
        return jax.random.uniform(k, (d_model, d_model), jnp.float32,
                                  -bound, bound)

    def b(k):
        return jax.random.uniform(k, (1, d_model), jnp.float32, -bound, bound)

    return {
        "wq": w(keys[0]), "bq": b(keys[1]),
        "wk": w(keys[2]), "bk": b(keys[3]),
        "wv": w(keys[4]), "bv": b(keys[5]),
        "wd": w(keys[6]), "bd": b(keys[7]),
    }


if __name__ == "__main__":
    key = jax.random.PRNGKey(0)
    k_x, k_p = jax.random.split(key)
    x = jax.random.normal(k_x, (BATCH, SEQ_LEN, D_MODEL), jnp.float32)
    params = init_params(k_p, D_MODEL)

    out = multi_headed_attention(x, params)
    out = jax.block_until_ready(out)

    ref = _reference(x, params)
    assert out.shape == (BATCH, SEQ_LEN, D_MODEL)
    err = float(jnp.max(jnp.abs(out - ref)))
    # approx=True reciprocal on the EUP costs a few e-4 of absolute error.
    assert err < 2e-3, err
    print("KERNEL_OK")
</pallas_src>

<mosaic_0001>
module attributes {stable_mosaic.version = 11 : i64} {
  func.func @_mha_kernel(%arg0: memref<16x32xf32, #tpu.memory_space<vmem>>, %arg1: memref<32x96xf32, #tpu.memory_space<vmem>>, %arg2: memref<1x96xf32, #tpu.memory_space<vmem>>, %arg3: memref<32x32xf32, #tpu.memory_space<vmem>>, %arg4: memref<1x32xf32, #tpu.memory_space<vmem>>, %arg5: memref<16x32xf32, #tpu.memory_space<vmem>>) attributes {dimension_semantics = [], scalar_prefetch = 0 : i64, scratch_operands = 0 : i64, tpu.core_type = #tpu.core_type<tc>} {
    %c0 = arith.constant 0 : index
    %c0_0 = arith.constant 0 : index
    %0 = vector.load %arg0[%c0, %c0_0] : memref<16x32xf32, #tpu.memory_space<vmem>>, vector<16x32xf32>
    %c0_1 = arith.constant 0 : index
    %c0_2 = arith.constant 0 : index
    %1 = vector.load %arg1[%c0_1, %c0_2] : memref<32x96xf32, #tpu.memory_space<vmem>>, vector<32x96xf32>
    %cst = arith.constant dense<0.000000e+00> : vector<16x96xf32>
    %2 = tpu.matmul %0, %1, %cst {dimension_numbers = #tpu.dot_dimension_numbers<[1], [0], [0], [1], [0, 0, 1, 1], [], []>} : vector<16x32xf32>, vector<32x96xf32>, vector<16x96xf32> -> vector<16x96xf32>
    %c0_3 = arith.constant 0 : index
    %c0_4 = arith.constant 0 : index
    %3 = vector.load %arg2[%c0_3, %c0_4] : memref<1x96xf32, #tpu.memory_space<vmem>>, vector<1x96xf32>
    %4 = vector.broadcast %3 : vector<1x96xf32> to vector<16x96xf32>
    %5 = arith.addf %2, %4 : vector<16x96xf32>
    %c0_5 = arith.constant 0 : index
    %c0_6 = arith.constant 0 : index
    %6 = vector.load %arg4[%c0_5, %c0_6] : memref<1x32xf32, #tpu.memory_space<vmem>>, vector<1x32xf32>
    %7 = vector.extract_strided_slice %5 {offsets = [0, 0], sizes = [8, 96], strides = [1, 1]} : vector<16x96xf32> to vector<8x96xf32>
    %cst_7 = arith.constant 0.000000e+00 : f32
    %8 = vector.broadcast %cst_7 : f32 to vector<8x32xf32>
    %9 = vector.extract_strided_slice %7 {offsets = [0, 0], sizes = [8, 8], strides = [1, 1]} : vector<8x96xf32> to vector<8x8xf32>
    %10 = vector.extract_strided_slice %7 {offsets = [0, 32], sizes = [8, 8], strides = [1, 1]} : vector<8x96xf32> to vector<8x8xf32>
    %11 = vector.extract_strided_slice %7 {offsets = [0, 64], sizes = [8, 8], strides = [1, 1]} : vector<8x96xf32> to vector<8x8xf32>
    "tpu.trace_start"() <{level = 10 : i32, message = "qd,kd->qk"}> : () -> ()
    %cst_8 = arith.constant dense<0.000000e+00> : vector<8x8xf32>
    %12 = tpu.matmul %9, %10, %cst_8 {dimension_numbers = #tpu.dot_dimension_numbers<[1], [1], [0], [0], [0, 0, 1, 0], [], []>} : vector<8x8xf32>, vector<8x8xf32>, vector<8x8xf32> -> vector<8x8xf32>
    "tpu.trace_stop"() : () -> ()
    %cst_9 = arith.constant 0.353553385 : f32
    %13 = vector.broadcast %cst_9 : f32 to vector<8x8xf32>
    %14 = arith.mulf %12, %13 : vector<8x8xf32>
    %cst_10 = arith.constant dense<0xFF800000> : vector<8xf32>
    %15 = vector.multi_reduction <maximumf>, %14, %cst_10 [1] : vector<8x8xf32> to vector<8xf32>
    %16 = vector.shape_cast %15 : vector<8xf32> to vector<8x1xf32>
    %17 = vector.broadcast %16 : vector<8x1xf32> to vector<8x8xf32>
    %18 = arith.subf %14, %17 : vector<8x8xf32>
    %19 = math.exp %18 : vector<8x8xf32>
    %cst_11 = arith.constant dense<0.000000e+00> : vector<8xf32>
    %20 = vector.multi_reduction <add>, %19, %cst_11 [1] : vector<8x8xf32> to vector<8xf32>
    %21 = vector.shape_cast %20 : vector<8xf32> to vector<8x1xf32>
    %22 = tpu.reciprocal %21 {approx = true} : vector<8x1xf32> -> vector<8x1xf32>
    %23 = vector.broadcast %22 : vector<8x1xf32> to vector<8x8xf32>
    %24 = arith.mulf %19, %23 : vector<8x8xf32>
    %cst_12 = arith.constant dense<0.000000e+00> : vector<8x8xf32>
    %25 = tpu.matmul %24, %11, %cst_12 {dimension_numbers = #tpu.dot_dimension_numbers<[1], [0], [0], [1], [0, 0, 1, 1], [], []>} : vector<8x8xf32>, vector<8x8xf32>, vector<8x8xf32> -> vector<8x8xf32>
    %c0_13 = arith.constant 0 : index
    %c0_14 = arith.constant 0 : index
    %26 = vector.load %arg3[%c0_13, %c0_14] : memref<32x32xf32, #tpu.memory_space<vmem>>, vector<8x32xf32>
    %cst_15 = arith.constant dense<0.000000e+00> : vector<8x32xf32>
    %27 = tpu.matmul %25, %26, %cst_15 {dimension_numbers = #tpu.dot_dimension_numbers<[1], [0], [0], [1], [0, 0, 1, 1], [], []>} : vector<8x8xf32>, vector<8x32xf32>, vector<8x32xf32> -> vector<8x32xf32>
    %28 = arith.addf %8, %27 : vector<8x32xf32>
    %29 = vector.extract_strided_slice %7 {offsets = [0, 8], sizes = [8, 8], strides = [1, 1]} : vector<8x96xf32> to vector<8x8xf32>
    %30 = vector.extract_strided_slice %7 {offsets = [0, 40], sizes = [8, 8], strides = [1, 1]} : vector<8x96xf32> to vector<8x8xf32>
    %31 = vector.extract_strided_slice %7 {offsets = [0, 72], sizes = [8, 8], strides = [1, 1]} : vector<8x96xf32> to vector<8x8xf32>
    "tpu.trace_start"() <{level = 10 : i32, message = "qd,kd->qk"}> : () -> ()
    %cst_16 = arith.constant dense<0.000000e+00> : vector<8x8xf32>
    %32 = tpu.matmul %29, %30, %cst_16 {dimension_numbers = #tpu.dot_dimension_numbers<[1], [1], [0], [0], [0, 0, 1, 0], [], []>} : vector<8x8xf32>, vector<8x8xf32>, vector<8x8xf32> -> vector<8x8xf32>
    "tpu.trace_stop"() : () -> ()
    %cst_17 = arith.constant 0.353553385 : f32
    %33 = vector.broadcast %cst_17 : f32 to vector<8x8xf32>
    %34 = arith.mulf %32, %33 : vector<8x8xf32>
    %cst_18 = arith.constant dense<0xFF800000> : vector<8xf32>
    %35 = vector.multi_reduction <maximumf>, %34, %cst_18 [1] : vector<8x8xf32> to vector<8xf32>
    %36 = vector.shape_cast %35 : vector<8xf32> to vector<8x1xf32>
    %37 = vector.broadcast %36 : vector<8x1xf32> to vector<8x8xf32>
    %38 = arith.subf %34, %37 : vector<8x8xf32>
    %39 = math.exp %38 : vector<8x8xf32>
    %cst_19 = arith.constant dense<0.000000e+00> : vector<8xf32>
    %40 = vector.multi_reduction <add>, %39, %cst_19 [1] : vector<8x8xf32> to vector<8xf32>
    %41 = vector.shape_cast %40 : vector<8xf32> to vector<8x1xf32>
    %42 = tpu.reciprocal %41 {approx = true} : vector<8x1xf32> -> vector<8x1xf32>
    %43 = vector.broadcast %42 : vector<8x1xf32> to vector<8x8xf32>
    %44 = arith.mulf %39, %43 : vector<8x8xf32>
    %cst_20 = arith.constant dense<0.000000e+00> : vector<8x8xf32>
    %45 = tpu.matmul %44, %31, %cst_20 {dimension_numbers = #tpu.dot_dimension_numbers<[1], [0], [0], [1], [0, 0, 1, 1], [], []>} : vector<8x8xf32>, vector<8x8xf32>, vector<8x8xf32> -> vector<8x8xf32>
    %c8 = arith.constant 8 : index
    %c0_21 = arith.constant 0 : index
    %46 = vector.load %arg3[%c8, %c0_21] : memref<32x32xf32, #tpu.memory_space<vmem>>, vector<8x32xf32>
    %cst_22 = arith.constant dense<0.000000e+00> : vector<8x32xf32>
    %47 = tpu.matmul %45, %46, %cst_22 {dimension_numbers = #tpu.dot_dimension_numbers<[1], [0], [0], [1], [0, 0, 1, 1], [], []>} : vector<8x8xf32>, vector<8x32xf32>, vector<8x32xf32> -> vector<8x32xf32>
    %48 = arith.addf %28, %47 : vector<8x32xf32>
    %49 = vector.extract_strided_slice %7 {offsets = [0, 16], sizes = [8, 8], strides = [1, 1]} : vector<8x96xf32> to vector<8x8xf32>
    %50 = vector.extract_strided_slice %7 {offsets = [0, 48], sizes = [8, 8], strides = [1, 1]} : vector<8x96xf32> to vector<8x8xf32>
    %51 = vector.extract_strided_slice %7 {offsets = [0, 80], sizes = [8, 8], strides = [1, 1]} : vector<8x96xf32> to vector<8x8xf32>
    "tpu.trace_start"() <{level = 10 : i32, message = "qd,kd->qk"}> : () -> ()
    %cst_23 = arith.constant dense<0.000000e+00> : vector<8x8xf32>
    %52 = tpu.matmul %49, %50, %cst_23 {dimension_numbers = #tpu.dot_dimension_numbers<[1], [1], [0], [0], [0, 0, 1, 0], [], []>} : vector<8x8xf32>, vector<8x8xf32>, vector<8x8xf32> -> vector<8x8xf32>
    "tpu.trace_stop"() : () -> ()
    %cst_24 = arith.constant 0.353553385 : f32
    %53 = vector.broadcast %cst_24 : f32 to vector<8x8xf32>
    %54 = arith.mulf %52, %53 : vector<8x8xf32>
    %cst_25 = arith.constant dense<0xFF800000> : vector<8xf32>
    %55 = vector.multi_reduction <maximumf>, %54, %cst_25 [1] : vector<8x8xf32> to vector<8xf32>
    %56 = vector.shape_cast %55 : vector<8xf32> to vector<8x1xf32>
    %57 = vector.broadcast %56 : vector<8x1xf32> to vector<8x8xf32>
    %58 = arith.subf %54, %57 : vector<8x8xf32>
    %59 = math.exp %58 : vector<8x8xf32>
    %cst_26 = arith.constant dense<0.000000e+00> : vector<8xf32>
    %60 = vector.multi_reduction <add>, %59, %cst_26 [1] : vector<8x8xf32> to vector<8xf32>
    %61 = vector.shape_cast %60 : vector<8xf32> to vector<8x1xf32>
    %62 = tpu.reciprocal %61 {approx = true} : vector<8x1xf32> -> vector<8x1xf32>
    %63 = vector.broadcast %62 : vector<8x1xf32> to vector<8x8xf32>
    %64 = arith.mulf %59, %63 : vector<8x8xf32>
    %cst_27 = arith.constant dense<0.000000e+00> : vector<8x8xf32>
    %65 = tpu.matmul %64, %51, %cst_27 {dimension_numbers = #tpu.dot_dimension_numbers<[1], [0], [0], [1], [0, 0, 1, 1], [], []>} : vector<8x8xf32>, vector<8x8xf32>, vector<8x8xf32> -> vector<8x8xf32>
    %c16 = arith.constant 16 : index
    %c0_28 = arith.constant 0 : index
    %66 = vector.load %arg3[%c16, %c0_28] : memref<32x32xf32, #tpu.memory_space<vmem>>, vector<8x32xf32>
    %cst_29 = arith.constant dense<0.000000e+00> : vector<8x32xf32>
    %67 = tpu.matmul %65, %66, %cst_29 {dimension_numbers = #tpu.dot_dimension_numbers<[1], [0], [0], [1], [0, 0, 1, 1], [], []>} : vector<8x8xf32>, vector<8x32xf32>, vector<8x32xf32> -> vector<8x32xf32>
    %68 = arith.addf %48, %67 : vector<8x32xf32>
    %69 = vector.extract_strided_slice %7 {offsets = [0, 24], sizes = [8, 8], strides = [1, 1]} : vector<8x96xf32> to vector<8x8xf32>
    %70 = vector.extract_strided_slice %7 {offsets = [0, 56], sizes = [8, 8], strides = [1, 1]} : vector<8x96xf32> to vector<8x8xf32>
    %71 = vector.extract_strided_slice %7 {offsets = [0, 88], sizes = [8, 8], strides = [1, 1]} : vector<8x96xf32> to vector<8x8xf32>
    "tpu.trace_start"() <{level = 10 : i32, message = "qd,kd->qk"}> : () -> ()
    %cst_30 = arith.constant dense<0.000000e+00> : vector<8x8xf32>
    %72 = tpu.matmul %69, %70, %cst_30 {dimension_numbers = #tpu.dot_dimension_numbers<[1], [1], [0], [0], [0, 0, 1, 0], [], []>} : vector<8x8xf32>, vector<8x8xf32>, vector<8x8xf32> -> vector<8x8xf32>
    "tpu.trace_stop"() : () -> ()
    %cst_31 = arith.constant 0.353553385 : f32
    %73 = vector.broadcast %cst_31 : f32 to vector<8x8xf32>
    %74 = arith.mulf %72, %73 : vector<8x8xf32>
    %cst_32 = arith.constant dense<0xFF800000> : vector<8xf32>
    %75 = vector.multi_reduction <maximumf>, %74, %cst_32 [1] : vector<8x8xf32> to vector<8xf32>
    %76 = vector.shape_cast %75 : vector<8xf32> to vector<8x1xf32>
    %77 = vector.broadcast %76 : vector<8x1xf32> to vector<8x8xf32>
    %78 = arith.subf %74, %77 : vector<8x8xf32>
    %79 = math.exp %78 : vector<8x8xf32>
    %cst_33 = arith.constant dense<0.000000e+00> : vector<8xf32>
    %80 = vector.multi_reduction <add>, %79, %cst_33 [1] : vector<8x8xf32> to vector<8xf32>
    %81 = vector.shape_cast %80 : vector<8xf32> to vector<8x1xf32>
    %82 = tpu.reciprocal %81 {approx = true} : vector<8x1xf32> -> vector<8x1xf32>
    %83 = vector.broadcast %82 : vector<8x1xf32> to vector<8x8xf32>
    %84 = arith.mulf %79, %83 : vector<8x8xf32>
    %cst_34 = arith.constant dense<0.000000e+00> : vector<8x8xf32>
    %85 = tpu.matmul %84, %71, %cst_34 {dimension_numbers = #tpu.dot_dimension_numbers<[1], [0], [0], [1], [0, 0, 1, 1], [], []>} : vector<8x8xf32>, vector<8x8xf32>, vector<8x8xf32> -> vector<8x8xf32>
    %c24 = arith.constant 24 : index
    %c0_35 = arith.constant 0 : index
    %86 = vector.load %arg3[%c24, %c0_35] : memref<32x32xf32, #tpu.memory_space<vmem>>, vector<8x32xf32>
    %cst_36 = arith.constant dense<0.000000e+00> : vector<8x32xf32>
    %87 = tpu.matmul %85, %86, %cst_36 {dimension_numbers = #tpu.dot_dimension_numbers<[1], [0], [0], [1], [0, 0, 1, 1], [], []>} : vector<8x8xf32>, vector<8x32xf32>, vector<8x32xf32> -> vector<8x32xf32>
    %88 = arith.addf %68, %87 : vector<8x32xf32>
    %89 = vector.broadcast %6 : vector<1x32xf32> to vector<8x32xf32>
    %90 = arith.addf %88, %89 : vector<8x32xf32>
    %c0_37 = arith.constant 0 : index
    %c0_38 = arith.constant 0 : index
    %91 = vector.load %arg5[%c0_37, %c0_38] : memref<16x32xf32, #tpu.memory_space<vmem>>, vector<8x32xf32>
    tpu.vector_store %arg5[%c0_37, %c0_38], %90 {strides = array<i32>} : memref<16x32xf32, #tpu.memory_space<vmem>>, vector<8x32xf32>,
    %92 = vector.extract_strided_slice %5 {offsets = [8, 0], sizes = [8, 96], strides = [1, 1]} : vector<16x96xf32> to vector<8x96xf32>
    %cst_39 = arith.constant 0.000000e+00 : f32
    %93 = vector.broadcast %cst_39 : f32 to vector<8x32xf32>
    %94 = vector.extract_strided_slice %92 {offsets = [0, 0], sizes = [8, 8], strides = [1, 1]} : vector<8x96xf32> to vector<8x8xf32>
    %95 = vector.extract_strided_slice %92 {offsets = [0, 32], sizes = [8, 8], strides = [1, 1]} : vector<8x96xf32> to vector<8x8xf32>
    %96 = vector.extract_strided_slice %92 {offsets = [0, 64], sizes = [8, 8], strides = [1, 1]} : vector<8x96xf32> to vector<8x8xf32>
    "tpu.trace_start"() <{level = 10 : i32, message = "qd,kd->qk"}> : () -> ()
    %cst_40 = arith.constant dense<0.000000e+00> : vector<8x8xf32>
    %97 = tpu.matmul %94, %95, %cst_40 {dimension_numbers = #tpu.dot_dimension_numbers<[1], [1], [0], [0], [0, 0, 1, 0], [], []>} : vector<8x8xf32>, vector<8x8xf32>, vector<8x8xf32> -> vector<8x8xf32>
    "tpu.trace_stop"() : () -> ()
    %cst_41 = arith.constant 0.353553385 : f32
    %98 = vector.broadcast %cst_41 : f32 to vector<8x8xf32>
    %99 = arith.mulf %97, %98 : vector<8x8xf32>
    %cst_42 = arith.constant dense<0xFF800000> : vector<8xf32>
    %100 = vector.multi_reduction <maximumf>, %99, %cst_42 [1] : vector<8x8xf32> to vector<8xf32>
    %101 = vector.shape_cast %100 : vector<8xf32> to vector<8x1xf32>
    %102 = vector.broadcast %101 : vector<8x1xf32> to vector<8x8xf32>
    %103 = arith.subf %99, %102 : vector<8x8xf32>
    %104 = math.exp %103 : vector<8x8xf32>
    %cst_43 = arith.constant dense<0.000000e+00> : vector<8xf32>
    %105 = vector.multi_reduction <add>, %104, %cst_43 [1] : vector<8x8xf32> to vector<8xf32>
    %106 = vector.shape_cast %105 : vector<8xf32> to vector<8x1xf32>
    %107 = tpu.reciprocal %106 {approx = true} : vector<8x1xf32> -> vector<8x1xf32>
    %108 = vector.broadcast %107 : vector<8x1xf32> to vector<8x8xf32>
    %109 = arith.mulf %104, %108 : vector<8x8xf32>
    %cst_44 = arith.constant dense<0.000000e+00> : vector<8x8xf32>
    %110 = tpu.matmul %109, %96, %cst_44 {dimension_numbers = #tpu.dot_dimension_numbers<[1], [0], [0], [1], [0, 0, 1, 1], [], []>} : vector<8x8xf32>, vector<8x8xf32>, vector<8x8xf32> -> vector<8x8xf32>
    %c0_45 = arith.constant 0 : index
    %c0_46 = arith.constant 0 : index
    %111 = vector.load %arg3[%c0_45, %c0_46] : memref<32x32xf32, #tpu.memory_space<vmem>>, vector<8x32xf32>
    %cst_47 = arith.constant dense<0.000000e+00> : vector<8x32xf32>
    %112 = tpu.matmul %110, %111, %cst_47 {dimension_numbers = #tpu.dot_dimension_numbers<[1], [0], [0], [1], [0, 0, 1, 1], [], []>} : vector<8x8xf32>, vector<8x32xf32>, vector<8x32xf32> -> vector<8x32xf32>
    %113 = arith.addf %93, %112 : vector<8x32xf32>
    %114 = vector.extract_strided_slice %92 {offsets = [0, 8], sizes = [8, 8], strides = [1, 1]} : vector<8x96xf32> to vector<8x8xf32>
    %115 = vector.extract_strided_slice %92 {offsets = [0, 40], sizes = [8, 8], strides = [1, 1]} : vector<8x96xf32> to vector<8x8xf32>
    %116 = vector.extract_strided_slice %92 {offsets = [0, 72], sizes = [8, 8], strides = [1, 1]} : vector<8x96xf32> to vector<8x8xf32>
    "tpu.trace_start"() <{level = 10 : i32, message = "qd,kd->qk"}> : () -> ()
    %cst_48 = arith.constant dense<0.000000e+00> : vector<8x8xf32>
    %117 = tpu.matmul %114, %115, %cst_48 {dimension_numbers = #tpu.dot_dimension_numbers<[1], [1], [0], [0], [0, 0, 1, 0], [], []>} : vector<8x8xf32>, vector<8x8xf32>, vector<8x8xf32> -> vector<8x8xf32>
    "tpu.trace_stop"() : () -> ()
    %cst_49 = arith.constant 0.353553385 : f32
    %118 = vector.broadcast %cst_49 : f32 to vector<8x8xf32>
    %119 = arith.mulf %117, %118 : vector<8x8xf32>
    %cst_50 = arith.constant dense<0xFF800000> : vector<8xf32>
    %120 = vector.multi_reduction <maximumf>, %119, %cst_50 [1] : vector<8x8xf32> to vector<8xf32>
    %121 = vector.shape_cast %120 : vector<8xf32> to vector<8x1xf32>
    %122 = vector.broadcast %121 : vector<8x1xf32> to vector<8x8xf32>
    %123 = arith.subf %119, %122 : vector<8x8xf32>
    %124 = math.exp %123 : vector<8x8xf32>
    %cst_51 = arith.constant dense<0.000000e+00> : vector<8xf32>
    %125 = vector.multi_reduction <add>, %124, %cst_51 [1] : vector<8x8xf32> to vector<8xf32>
    %126 = vector.shape_cast %125 : vector<8xf32> to vector<8x1xf32>
    %127 = tpu.reciprocal %126 {approx = true} : vector<8x1xf32> -> vector<8x1xf32>
    %128 = vector.broadcast %127 : vector<8x1xf32> to vector<8x8xf32>
    %129 = arith.mulf %124, %128 : vector<8x8xf32>
    %cst_52 = arith.constant dense<0.000000e+00> : vector<8x8xf32>
    %130 = tpu.matmul %129, %116, %cst_52 {dimension_numbers = #tpu.dot_dimension_numbers<[1], [0], [0], [1], [0, 0, 1, 1], [], []>} : vector<8x8xf32>, vector<8x8xf32>, vector<8x8xf32> -> vector<8x8xf32>
    %c8_53 = arith.constant 8 : index
    %c0_54 = arith.constant 0 : index
    %131 = vector.load %arg3[%c8_53, %c0_54] : memref<32x32xf32, #tpu.memory_space<vmem>>, vector<8x32xf32>
    %cst_55 = arith.constant dense<0.000000e+00> : vector<8x32xf32>
    %132 = tpu.matmul %130, %131, %cst_55 {dimension_numbers = #tpu.dot_dimension_numbers<[1], [0], [0], [1], [0, 0, 1, 1], [], []>} : vector<8x8xf32>, vector<8x32xf32>, vector<8x32xf32> -> vector<8x32xf32>
    %133 = arith.addf %113, %132 : vector<8x32xf32>
    %134 = vector.extract_strided_slice %92 {offsets = [0, 16], sizes = [8, 8], strides = [1, 1]} : vector<8x96xf32> to vector<8x8xf32>
    %135 = vector.extract_strided_slice %92 {offsets = [0, 48], sizes = [8, 8], strides = [1, 1]} : vector<8x96xf32> to vector<8x8xf32>
    %136 = vector.extract_strided_slice %92 {offsets = [0, 80], sizes = [8, 8], strides = [1, 1]} : vector<8x96xf32> to vector<8x8xf32>
    "tpu.trace_start"() <{level = 10 : i32, message = "qd,kd->qk"}> : () -> ()
    %cst_56 = arith.constant dense<0.000000e+00> : vector<8x8xf32>
    %137 = tpu.matmul %134, %135, %cst_56 {dimension_numbers = #tpu.dot_dimension_numbers<[1], [1], [0], [0], [0, 0, 1, 0], [], []>} : vector<8x8xf32>, vector<8x8xf32>, vector<8x8xf32> -> vector<8x8xf32>
    "tpu.trace_stop"() : () -> ()
    %cst_57 = arith.constant 0.353553385 : f32
    %138 = vector.broadcast %cst_57 : f32 to vector<8x8xf32>
    %139 = arith.mulf %137, %138 : vector<8x8xf32>
    %cst_58 = arith.constant dense<0xFF800000> : vector<8xf32>
    %140 = vector.multi_reduction <maximumf>, %139, %cst_58 [1] : vector<8x8xf32> to vector<8xf32>
    %141 = vector.shape_cast %140 : vector<8xf32> to vector<8x1xf32>
    %142 = vector.broadcast %141 : vector<8x1xf32> to vector<8x8xf32>
    %143 = arith.subf %139, %142 : vector<8x8xf32>
    %144 = math.exp %143 : vector<8x8xf32>
    %cst_59 = arith.constant dense<0.000000e+00> : vector<8xf32>
    %145 = vector.multi_reduction <add>, %144, %cst_59 [1] : vector<8x8xf32> to vector<8xf32>
    %146 = vector.shape_cast %145 : vector<8xf32> to vector<8x1xf32>
    %147 = tpu.reciprocal %146 {approx = true} : vector<8x1xf32> -> vector<8x1xf32>
    %148 = vector.broadcast %147 : vector<8x1xf32> to vector<8x8xf32>
    %149 = arith.mulf %144, %148 : vector<8x8xf32>
    %cst_60 = arith.constant dense<0.000000e+00> : vector<8x8xf32>
    %150 = tpu.matmul %149, %136, %cst_60 {dimension_numbers = #tpu.dot_dimension_numbers<[1], [0], [0], [1], [0, 0, 1, 1], [], []>} : vector<8x8xf32>, vector<8x8xf32>, vector<8x8xf32> -> vector<8x8xf32>
    %c16_61 = arith.constant 16 : index
    %c0_62 = arith.constant 0 : index
    %151 = vector.load %arg3[%c16_61, %c0_62] : memref<32x32xf32, #tpu.memory_space<vmem>>, vector<8x32xf32>
    %cst_63 = arith.constant dense<0.000000e+00> : vector<8x32xf32>
    %152 = tpu.matmul %150, %151, %cst_63 {dimension_numbers = #tpu.dot_dimension_numbers<[1], [0], [0], [1], [0, 0, 1, 1], [], []>} : vector<8x8xf32>, vector<8x32xf32>, vector<8x32xf32> -> vector<8x32xf32>
    %153 = arith.addf %133, %152 : vector<8x32xf32>
    %154 = vector.extract_strided_slice %92 {offsets = [0, 24], sizes = [8, 8], strides = [1, 1]} : vector<8x96xf32> to vector<8x8xf32>
    %155 = vector.extract_strided_slice %92 {offsets = [0, 56], sizes = [8, 8], strides = [1, 1]} : vector<8x96xf32> to vector<8x8xf32>
    %156 = vector.extract_strided_slice %92 {offsets = [0, 88], sizes = [8, 8], strides = [1, 1]} : vector<8x96xf32> to vector<8x8xf32>
    "tpu.trace_start"() <{level = 10 : i32, message = "qd,kd->qk"}> : () -> ()
    %cst_64 = arith.constant dense<0.000000e+00> : vector<8x8xf32>
    %157 = tpu.matmul %154, %155, %cst_64 {dimension_numbers = #tpu.dot_dimension_numbers<[1], [1], [0], [0], [0, 0, 1, 0], [], []>} : vector<8x8xf32>, vector<8x8xf32>, vector<8x8xf32> -> vector<8x8xf32>
    "tpu.trace_stop"() : () -> ()
    %cst_65 = arith.constant 0.353553385 : f32
    %158 = vector.broadcast %cst_65 : f32 to vector<8x8xf32>
    %159 = arith.mulf %157, %158 : vector<8x8xf32>
    %cst_66 = arith.constant dense<0xFF800000> : vector<8xf32>
    %160 = vector.multi_reduction <maximumf>, %159, %cst_66 [1] : vector<8x8xf32> to vector<8xf32>
    %161 = vector.shape_cast %160 : vector<8xf32> to vector<8x1xf32>
    %162 = vector.broadcast %161 : vector<8x1xf32> to vector<8x8xf32>
    %163 = arith.subf %159, %162 : vector<8x8xf32>
    %164 = math.exp %163 : vector<8x8xf32>
    %cst_67 = arith.constant dense<0.000000e+00> : vector<8xf32>
    %165 = vector.multi_reduction <add>, %164, %cst_67 [1] : vector<8x8xf32> to vector<8xf32>
    %166 = vector.shape_cast %165 : vector<8xf32> to vector<8x1xf32>
    %167 = tpu.reciprocal %166 {approx = true} : vector<8x1xf32> -> vector<8x1xf32>
    %168 = vector.broadcast %167 : vector<8x1xf32> to vector<8x8xf32>
    %169 = arith.mulf %164, %168 : vector<8x8xf32>
    %cst_68 = arith.constant dense<0.000000e+00> : vector<8x8xf32>
    %170 = tpu.matmul %169, %156, %cst_68 {dimension_numbers = #tpu.dot_dimension_numbers<[1], [0], [0], [1], [0, 0, 1, 1], [], []>} : vector<8x8xf32>, vector<8x8xf32>, vector<8x8xf32> -> vector<8x8xf32>
    %c24_69 = arith.constant 24 : index
    %c0_70 = arith.constant 0 : index
    %171 = vector.load %arg3[%c24_69, %c0_70] : memref<32x32xf32, #tpu.memory_space<vmem>>, vector<8x32xf32>
    %cst_71 = arith.constant dense<0.000000e+00> : vector<8x32xf32>
    %172 = tpu.matmul %170, %171, %cst_71 {dimension_numbers = #tpu.dot_dimension_numbers<[1], [0], [0], [1], [0, 0, 1, 1], [], []>} : vector<8x8xf32>, vector<8x32xf32>, vector<8x32xf32> -> vector<8x32xf32>
    %173 = arith.addf %153, %172 : vector<8x32xf32>
    %174 = vector.broadcast %6 : vector<1x32xf32> to vector<8x32xf32>
    %175 = arith.addf %173, %174 : vector<8x32xf32>
    %c8_72 = arith.constant 8 : index
    %c0_73 = arith.constant 0 : index
    %176 = vector.load %arg5[%c8_72, %c0_73] : memref<16x32xf32, #tpu.memory_space<vmem>>, vector<8x32xf32>
    tpu.vector_store %arg5[%c8_72, %c0_73], %175 {strides = array<i32>} : memref<16x32xf32, #tpu.memory_space<vmem>>, vector<8x32xf32>,
    return
  }
}

</mosaic_0001>

<llo_original>
// kernel: tpu_custom_call.1
$region0: #{tpu_custom_call.1}
  #allocation0 [shape = 'u32[]', space=smem, size = 0x4, offset = 0x4, fixed_abs, tag = 'smem constant byte address 0x4 - core index']
  #allocation1 [shape = 'u32[144,128]{1,0:T(1,128)}', space=vmem, size = 0x12000, scoped, tag = 'internal scratch']
  %s0 = inlined_call_operand.hbm [shape: f32[16,32], index: 0, kind: input, shape index: {}]
  %s1 = inlined_call_operand.hbm [shape: f32[32,96], index: 1, kind: input, shape index: {}]
  %s2 = inlined_call_operand.vmem [shape: f32[1,96], index: 2, kind: input, shape index: {}]
  %s3 = inlined_call_operand.hbm [shape: f32[32,32], index: 3, kind: input, shape index: {}]
  %s4 = inlined_call_operand.vmem [shape: f32[1,32], index: 4, kind: input, shape index: {}]
  %s5 = inlined_call_operand.hbm [shape: f32[16,32], index: 5, kind: output, shape index: {}]
  %s6 = sld [smem:[#allocation0]]
  $region42: #{tpu_custom_call.1} parent=0
    _
  %s8 = ssub.s32 1, %s6
  %s9 = scalar_select 0, %s8, %s6
  $region1: #{tpu_custom_call.1} parent=0
    #allocation2 [shape = 'u8[8192]{0}', space=vmem, size = 0x2000, scoped, tag = 'input window, operand 0, single buffered']
    #allocation3 [shape = 's32[1]{0}', space=sflag, size = 0x4, scoped, tag = 'scoped memory for tpu_custom_call.1']
    #allocation4 [shape = 's32[1]{0}', space=sflag, size = 0x4, scoped, tag = 'scoped memory for tpu_custom_call.1']
    #allocation5 [shape = 'u8[16384]{0}', space=vmem, size = 0x4000, scoped, tag = 'input window, operand 1, single buffered']
    #allocation6 [shape = 's32[1]{0}', space=sflag, size = 0x4, scoped, tag = 'scoped memory for tpu_custom_call.1']
    #allocation7 [shape = 'u8[16384]{0}', space=vmem, size = 0x4000, scoped, tag = 'input window, operand 3, single buffered']
    #allocation8 [shape = 'u8[8192]{0}', space=vmem, size = 0x2000, scoped, tag = 'output window, operand 0, single buffered']
    %10 = vsyncpa [#allocation3], 0
    %11 = vsyncpa [#allocation6], 0
    %12 = vsyncpa [#allocation4], 0
    // Predicated region
    $region2: #{tpu_custom_call.1} parent=1 // pred_check
      _
    $region3: #{tpu_custom_call.1} parent=1 // pred_check_branch
      %14 = sbr.rel (0) target = $region5
    $region4: #{tpu_custom_call.1} parent=1 // pred_region
      %s16 = ssub.s32 256, 256
      %17 = vsyncadd [#allocation3], %s16
      %s18 = sshll.u32 [#allocation2], 4
      %s19 = int_to_ptr.vmem [resolvable:$true] %s18
      %24 = dma.hbm_to_vmem [thread:$0]  %s0, 256, %s19, [#allocation3], 128, 128, 8
    $region5: #{tpu_custom_call.1} parent=1 // pred_fallthru
      _
    // Predicated region
    $region6: #{tpu_custom_call.1} parent=1 // pred_check
      _
    $region7: #{tpu_custom_call.1} parent=1 // pred_check_branch
      %26 = sbr.rel (0) target = $region9
    $region8: #{tpu_custom_call.1} parent=1 // pred_region
      %s28 = ssub.s32 512, 512
      %29 = vsyncadd [#allocation6], %s28
      %s30 = sshll.u32 [#allocation5], 4
      %s31 = int_to_ptr.vmem [resolvable:$true] %s30
      %36 = dma.hbm_to_vmem [thread:$0]  %s1, 512, %s31, [#allocation6], 128, 128, 8
    $region9: #{tpu_custom_call.1} parent=1 // pred_fallthru
      _
    // Predicated region
    $region10: #{tpu_custom_call.1} parent=1 // pred_check
      _
    $region11: #{tpu_custom_call.1} parent=1 // pred_check_branch
      %38 = sbr.rel (0) target = $region13
    $region12: #{tpu_custom_call.1} parent=1 // pred_region
      _
    $region13: #{tpu_custom_call.1} parent=1 // pred_fallthru
      _
    // Predicated region
    $region14: #{tpu_custom_call.1} parent=1 // pred_check
      _
    $region15: #{tpu_custom_call.1} parent=1 // pred_check_branch
      %40 = sbr.rel (0) target = $region17
    $region16: #{tpu_custom_call.1} parent=1 // pred_region
      %s42 = ssub.s32 512, 512
      %43 = vsyncadd [#allocation6], %s42
      %s44 = sshll.u32 [#allocation7], 4
      %s45 = int_to_ptr.vmem [resolvable:$true] %s44
      %50 = dma.hbm_to_vmem [thread:$0]  %s3, 512, %s45, [#allocation6], 128, 128, 8
    $region17: #{tpu_custom_call.1} parent=1 // pred_fallthru
      _
    // Predicated region
    $region18: #{tpu_custom_call.1} parent=1 // pred_check
      _
    $region19: #{tpu_custom_call.1} parent=1 // pred_check_branch
      %52 = sbr.rel (0) target = $region21
    $region20: #{tpu_custom_call.1} parent=1 // pred_region
      _
    $region21: #{tpu_custom_call.1} parent=1 // pred_fallthru
      _
    // Predicated region
    $region22: #{tpu_custom_call.1} parent=1 // pred_check
      _
    $region23: #{tpu_custom_call.1} parent=1 // pred_check_branch
      %54 = sbr.rel (0) target = $region25
    $region24: #{tpu_custom_call.1} parent=1 // pred_region
      %55 = dma.done [#allocation3], 256
    $region25: #{tpu_custom_call.1} parent=1 // pred_fallthru
      _
    // Predicated region
    $region26: #{tpu_custom_call.1} parent=1 // pred_check
      _
    $region27: #{tpu_custom_call.1} parent=1 // pred_check_branch
      %57 = sbr.rel (0) target = $region29
    $region28: #{tpu_custom_call.1} parent=1 // pred_region
      %58 = dma.done [#allocation6], 512
    $region29: #{tpu_custom_call.1} parent=1 // pred_fallthru
      _
    // Predicated region
    $region30: #{tpu_custom_call.1} parent=1 // pred_check
      _
    $region31: #{tpu_custom_call.1} parent=1 // pred_check_branch
      %60 = sbr.rel (0) target = $region33
    $region32: #{tpu_custom_call.1} parent=1 // pred_region
      %61 = dma.done [#allocation6], 512
    $region33: #{tpu_custom_call.1} parent=1 // pred_fallthru
      _
    %v62 = vld [vmem:[#allocation2] sm:$0xff]
    %v63 = vld [vmem:[#allocation2 + $0x8] sm:$0xff]
    %v64 = vld [vmem:[#allocation5] sm:$0xff]
    %v65 = vld [vmem:[#allocation5 + $0x8] sm:$0xff]
    %v66 = vld [vmem:[#allocation5 + $0x10] sm:$0xff]
    %v67 = vld [vmem:[#allocation5 + $0x18] sm:$0xff]
    %v68 = vld [vmem:[%s2] sm:$0x1]
    %v70 = vlaneseq
    %v71 = vshrl.u32 %v70, 7
    %v72 = vsub.s32 0, %v71
    %v73 = vrot.slane %v68, %v72
    %vm75 = vcmask 261120
    %v77 = vsel %vm75, %v62, 0
    %v80 = vsel %vm75, %v63, 0
    %82 = vmatprep.subr.mxu0 0.0
    %83 = vmatpush1.msra.mxu0 0.0
    %84 = vmatprep.subr.mxu0 0.0
    %85 = vmatpush1.msra.mxu0 0.0
    %86 = vmatprep.subr.mxu0 0.0
    %87 = vmatpush1.msra.mxu0 0.0
    %88 = vmatprep.subr.mxu0 0.0
    %89 = vmatpush1.msra.mxu0 0.0
    %90 = vmatprep.subr.mxu0 0.0
    %91 = vmatpush1.msra.mxu0 0.0
    %92 = vmatprep.subr.mxu0 0.0
    %93 = vmatpush1.msra.mxu0 0.0
    %94 = vmatprep.subr.mxu0 0.0
    %95 = vmatpush1.msra.mxu0 0.0
    %96 = vmatprep.subr.mxu0 0.0
    %97 = vmatpush1.msra.mxu0 0.0
    %98 = vmatprep.subr.mxu0 0.0
    %99 = vmatpush1.msra.mxu0 0.0
    %100 = vmatprep.subr.mxu0 0.0
    %101 = vmatpush1.msra.mxu0 0.0
    %102 = vmatprep.subr.mxu0 0.0
    %103 = vmatpush1.msra.mxu0 0.0
    %104 = vmatprep.subr.mxu0 0.0
    %105 = vmatpush1.msra.mxu0 0.0
    %106 = vmatprep.subr.mxu0 0.0
    %107 = vmatpush1.msra.mxu0 %v67
    %108 = vmatprep.subr.mxu0 0.0
    %109 = vmatpush1.msra.mxu0 %v66
    %110 = vmatprep.subr.mxu0 0.0
    %111 = vmatpush1.msra.mxu0 %v65
    %112 = vmatprep.subr.mxu0 0.0
    %113 = vmatpush1.msra.mxu0 %v64
    %114 = vmatprep.subr.mxu0 0.0
    %115 = vmatpush2.msra.mxu0 0.0
    %116 = vmatprep.subr.mxu0 0.0
    %117 = vmatpush2.msra.mxu0 0.0
    %118 = vmatprep.subr.mxu0 0.0
    %119 = vmatpush2.msra.mxu0 0.0
    %120 = vmatprep.subr.mxu0 0.0
    %121 = vmatpush2.msra.mxu0 0.0
    %122 = vmatprep.subr.mxu0 0.0
    %123 = vmatpush2.msra.mxu0 0.0
    %124 = vmatprep.subr.mxu0 0.0
    %125 = vmatpush2.msra.mxu0 0.0
    %126 = vmatprep.subr.mxu0 0.0
    %127 = vmatpush2.msra.mxu0 0.0
    %128 = vmatprep.subr.mxu0 0.0
    %129 = vmatpush2.msra.mxu0 0.0
    %130 = vmatprep.subr.mxu0 0.0
    %131 = vmatpush2.msra.mxu0 0.0
    %132 = vmatprep.subr.mxu0 0.0
    %133 = vmatpush2.msra.mxu0 0.0
    %134 = vmatprep.subr.mxu0 0.0
    %135 = vmatpush2.msra.mxu0 0.0
    %136 = vmatprep.subr.mxu0 0.0
    %137 = vmatpush2.msra.mxu0 0.0
    %138 = vmatprep.subr.mxu0 0.0
    %139 = vmatpush2.msra.mxu0 0.0
    %140 = vmatprep.subr.mxu0 0.0
    %141 = vmatpush2.msra.mxu0 0.0
    %142 = vmatprep.subr.mxu0 0.0
    %143 = vmatpush2.msra.mxu0 0.0
    %144 = vmatprep.subr.mxu0 0.0
    %145 = vmatpush2.msra.mxu0 0.0
    %146 = vmatprep.mubr.f32.mxu0 0.0
    %147 = vmatmul.mubr.f32.gmra.mxu0 %v77
    %v148 = vpop.f32.mrf.mxu0
    %v149 = vadd.f32 %v73, %v148
    %v150 = vpop.f32.mrf.mxu0
    %151 = vmatprep.mubr.f32.mxu0 0.0
    %152 = vmatmul.mubr.f32.gmra.mxu0 %v80
    %v153 = vpop.f32.mrf.mxu0
    %v154 = vadd.f32 %v73, %v153
    %v155 = vpop.f32.mrf.mxu0
    %156 = vdwg.mxu0
    %v157 = vld [vmem:[%s4] sm:$0x1]
    %159 = vrot.lane.b32.xlu0 %v149, 96
    %v160 = vpop.permute.xlu0 %159
    %vm161 = vcmask 64512
    %v162 = vsel %vm161, %v149, 0
    %v164 = vsel %vm161, %v160, 0
    %166 = vmatprep.subr.mxu0 0.0
    %167 = vmatpush1.xpose.msra.mxu0 0.0
    %168 = vmatprep.subr.mxu0 0.0
    %169 = vmatpush1.xpose.msra.mxu0 0.0
    %170 = vmatprep.subr.mxu0 0.0
    %171 = vmatpush1.xpose.msra.mxu0 0.0
    %172 = vmatprep.subr.mxu0 0.0
    %173 = vmatpush1.xpose.msra.mxu0 0.0
    %174 = vmatprep.subr.mxu0 0.0
    %175 = vmatpush1.xpose.msra.mxu0 0.0
    %176 = vmatprep.subr.mxu0 0.0
    %177 = vmatpush1.xpose.msra.mxu0 0.0
    %178 = vmatprep.subr.mxu0 0.0
    %179 = vmatpush1.xpose.msra.mxu0 0.0
    %180 = vmatprep.subr.mxu0 0.0
    %181 = vmatpush1.xpose.msra.mxu0 0.0
    %182 = vmatprep.subr.mxu0 0.0
    %183 = vmatpush1.xpose.msra.mxu0 0.0
    %184 = vmatprep.subr.mxu0 0.0
    %185 = vmatpush1.xpose.msra.mxu0 0.0
    %186 = vmatprep.subr.mxu0 0.0
    %187 = vmatpush1.xpose.msra.mxu0 0.0
    %188 = vmatprep.subr.mxu0 0.0
    %189 = vmatpush1.xpose.msra.mxu0 0.0
    %190 = vmatprep.subr.mxu0 0.0
    %191 = vmatpush1.xpose.msra.mxu0 0.0
    %192 = vmatprep.subr.mxu0 0.0
    %193 = vmatpush1.xpose.msra.mxu0 0.0
    %194 = vmatprep.subr.mxu0 0.0
    %195 = vmatpush1.xpose.msra.mxu0 0.0
    %196 = vmatprep.subr.mxu0 0.0
    %197 = vmatpush1.xpose.msra.mxu0 %v164
    %198 = vmatprep.subr.mxu0 0.0
    %199 = vmatpush2.xpose.msra.mxu0 0.0
    %200 = vmatprep.subr.mxu0 0.0
    %201 = vmatpush2.xpose.msra.mxu0 0.0
    %202 = vmatprep.subr.mxu0 0.0
    %203 = vmatpush2.xpose.msra.mxu0 0.0
    %204 = vmatprep.subr.mxu0 0.0
    %205 = vmatpush2.xpose.msra.mxu0 0.0
    %206 = vmatprep.subr.mxu0 0.0
    %207 = vmatpush2.xpose.msra.mxu0 0.0
    %208 = vmatprep.subr.mxu0 0.0
    %209 = vmatpush2.xpose.msra.mxu0 0.0
    %210 = vmatprep.subr.mxu0 0.0
    %211 = vmatpush2.xpose.msra.mxu0 0.0
    %212 = vmatprep.subr.mxu0 0.0
    %213 = vmatpush2.xpose.msra.mxu0 0.0
    %214 = vmatprep.subr.mxu0 0.0
    %215 = vmatpush2.xpose.msra.mxu0 0.0
    %216 = vmatprep.subr.mxu0 0.0
    %217 = vmatpush2.xpose.msra.mxu0 0.0
    %218 = vmatprep.subr.mxu0 0.0
    %219 = vmatpush2.xpose.msra.mxu0 0.0
    %220 = vmatprep.subr.mxu0 0.0
    %221 = vmatpush2.xpose.msra.mxu0 0.0
    %222 = vmatprep.subr.mxu0 0.0
    %223 = vmatpush2.xpose.msra.mxu0 0.0
    %224 = vmatprep.subr.mxu0 0.0
    %225 = vmatpush2.xpose.msra.mxu0 0.0
    %226 = vmatprep.subr.mxu0 0.0
    %227 = vmatpush2.xpose.msra.mxu0 0.0
    %228 = vmatprep.subr.mxu0 0.0
    %229 = vmatpush2.xpose.msra.mxu0 0.0
    %230 = vmatprep.mubr.f32.mxu0 0.0
    %231 = vmatmul.mubr.f32.gmra.mxu0 %v162
    %v232 = vpop.f32.mrf.mxu0
    %v233 = vadd.f32 0.0, %v232
    %v234 = vpop.f32.mrf.mxu0
    %235 = vdwg.mxu0
    %v236 = vmul.f32 %v233, 0.35355338
    %v237 = vsel %vm161, %v236, -inf
    %238 = vmax.xlane.f32.xlu0 %v237
    %v239 = vpop.xlane.xlu0 %238
    %v240 = vsub.f32 %v236, %v239
    %v241 = vmul.f32 %v240, 1.442695
    %v242 = vpow.pop %v241
    %v243 = vsel %vm161, %v242, 0.0
    %244 = vadd.xlane.f32.xlu0 %v243
    %v245 = vpop.xlane.xlu0 %244
    %v246 = vrcp.pop %v245
    %v247 = vmul.f32 %v242, %v246
    %248 = vrot.lane.b32.xlu0 %v149, 64
    %v249 = vpop.permute.xlu0 %248
    %v252 = vsel %vm161, %v247, 0
    %254 = vmatprep.subr.mxu0 0.0
    %255 = vmatpush1.msra.mxu0 0.0
    %256 = vmatprep.subr.mxu0 0.0
    %257 = vmatpush1.msra.mxu0 0.0
    %258 = vmatprep.subr.mxu0 0.0
    %259 = vmatpush1.msra.mxu0 0.0
    %260 = vmatprep.subr.mxu0 0.0
    %261 = vmatpush1.msra.mxu0 0.0
    %262 = vmatprep.subr.mxu0 0.0
    %263 = vmatpush1.msra.mxu0 0.0
    %264 = vmatprep.subr.mxu0 0.0
    %265 = vmatpush1.msra.mxu0 0.0
    %266 = vmatprep.subr.mxu0 0.0
    %267 = vmatpush1.msra.mxu0 0.0
    %268 = vmatprep.subr.mxu0 0.0
    %269 = vmatpush1.msra.mxu0 0.0
    %270 = vmatprep.subr.mxu0 0.0
    %271 = vmatpush1.msra.mxu0 0.0
    %272 = vmatprep.subr.mxu0 0.0
    %273 = vmatpush1.msra.mxu0 0.0
    %274 = vmatprep.subr.mxu0 0.0
    %275 = vmatpush1.msra.mxu0 0.0
    %276 = vmatprep.subr.mxu0 0.0
    %277 = vmatpush1.msra.mxu0 0.0
    %278 = vmatprep.subr.mxu0 0.0
    %279 = vmatpush1.msra.mxu0 0.0
    %280 = vmatprep.subr.mxu0 0.0
    %281 = vmatpush1.msra.mxu0 0.0
    %282 = vmatprep.subr.mxu0 0.0
    %283 = vmatpush1.msra.mxu0 0.0
    %284 = vmatprep.subr.mxu0 0.0
    %285 = vmatpush1.msra.mxu0 %v249
    %286 = vmatprep.subr.mxu0 0.0
    %287 = vmatpush2.msra.mxu0 0.0
    %288 = vmatprep.subr.mxu0 0.0
    %289 = vmatpush2.msra.mxu0 0.0
    %290 = vmatprep.subr.mxu0 0.0
    %291 = vmatpush2.msra.mxu0 0.0
    %292 = vmatprep.subr.mxu0 0.0
    %293 = vmatpush2.msra.mxu0 0.0
    %294 = vmatprep.subr.mxu0 0.0
    %295 = vmatpush2.msra.mxu0 0.0
    %296 = vmatprep.subr.mxu0 0.0
    %297 = vmatpush2.msra.mxu0 0.0
    %298 = vmatprep.subr.mxu0 0.0
    %299 = vmatpush2.msra.mxu0 0.0
    %300 = vmatprep.subr.mxu0 0.0
    %301 = vmatpush2.msra.mxu0 0.0
    %302 = vmatprep.subr.mxu0 0.0
    %303 = vmatpush2.msra.mxu0 0.0
    %304 = vmatprep.subr.mxu0 0.0
    %305 = vmatpush2.msra.mxu0 0.0
    %306 = vmatprep.subr.mxu0 0.0
    %307 = vmatpush2.msra.mxu0 0.0
    %308 = vmatprep.subr.mxu0 0.0
    %309 = vmatpush2.msra.mxu0 0.0
    %310 = vmatprep.subr.mxu0 0.0
    %311 = vmatpush2.msra.mxu0 0.0
    %312 = vmatprep.subr.mxu0 0.0
    %313 = vmatpush2.msra.mxu0 0.0
    %314 = vmatprep.subr.mxu0 0.0
    %315 = vmatpush2.msra.mxu0 0.0
    %316 = vmatprep.subr.mxu0 0.0
    %317 = vmatpush2.msra.mxu0 0.0
    %318 = vmatprep.mubr.f32.mxu0 0.0
    %319 = vmatmul.mubr.f32.gmra.mxu0 %v252
    %v320 = vpop.f32.mrf.mxu0
    %v321 = vadd.f32 0.0, %v320
    %v322 = vpop.f32.mrf.mxu0
    %323 = vdwg.mxu0
    %v324 = vld [vmem:[#allocation7] sm:$0xff]
    %325 = vrot.lane.b32.xlu0 %v149, 120
    %v326 = vpop.permute.xlu0 %325
    %327 = vrot.lane.b32.xlu0 %v149, 88
    %v328 = vpop.permute.xlu0 %327
    %v329 = vsel %vm161, %v326, 0
    %v331 = vsel %vm161, %v328, 0
    %333 = vmatprep.subr.mxu0 0.0
    %334 = vmatpush1.xpose.msra.mxu0 0.0
    %335 = vmatprep.subr.mxu0 0.0
    %336 = vmatpush1.xpose.msra.mxu0 0.0
    %337 = vmatprep.subr.mxu0 0.0
    %338 = vmatpush1.xpose.msra.mxu0 0.0
    %339 = vmatprep.subr.mxu0 0.0
    %340 = vmatpush1.xpose.msra.mxu0 0.0
    %341 = vmatprep.subr.mxu0 0.0
    %342 = vmatpush1.xpose.msra.mxu0 0.0
    %343 = vmatprep.subr.mxu0 0.0
    %344 = vmatpush1.xpose.msra.mxu0 0.0
    %345 = vmatprep.subr.mxu0 0.0
    %346 = vmatpush1.xpose.msra.mxu0 0.0
    %347 = vmatprep.subr.mxu0 0.0
    %348 = vmatpush1.xpose.msra.mxu0 0.0
    %349 = vmatprep.subr.mxu0 0.0
    %350 = vmatpush1.xpose.msra.mxu0 0.0
    %351 = vmatprep.subr.mxu0 0.0
    %352 = vmatpush1.xpose.msra.mxu0 0.0
    %353 = vmatprep.subr.mxu0 0.0
    %354 = vmatpush1.xpose.msra.mxu0 0.0
    %355 = vmatprep.subr.mxu0 0.0
    %356 = vmatpush1.xpose.msra.mxu0 0.0
    %357 = vmatprep.subr.mxu0 0.0
    %358 = vmatpush1.xpose.msra.mxu0 0.0
    %359 = vmatprep.subr.mxu0 0.0
    %360 = vmatpush1.xpose.msra.mxu0 0.0
    %361 = vmatprep.subr.mxu0 0.0
    %362 = vmatpush1.xpose.msra.mxu0 0.0
    %363 = vmatprep.subr.mxu0 0.0
    %364 = vmatpush1.xpose.msra.mxu0 %v331
    %365 = vmatprep.subr.mxu0 0.0
    %366 = vmatpush2.xpose.msra.mxu0 0.0
    %367 = vmatprep.subr.mxu0 0.0
    %368 = vmatpush2.xpose.msra.mxu0 0.0
    %369 = vmatprep.subr.mxu0 0.0
    %370 = vmatpush2.xpose.msra.mxu0 0.0
    %371 = vmatprep.subr.mxu0 0.0
    %372 = vmatpush2.xpose.msra.mxu0 0.0
    %373 = vmatprep.subr.mxu0 0.0
    %374 = vmatpush2.xpose.msra.mxu0 0.0
    %375 = vmatprep.subr.mxu0 0.0
    %376 = vmatpush2.xpose.msra.mxu0 0.0
    %377 = vmatprep.subr.mxu0 0.0
    %378 = vmatpush2.xpose.msra.mxu0 0.0
    %379 = vmatprep.subr.mxu0 0.0
    %380 = vmatpush2.xpose.msra.mxu0 0.0
    %381 = vmatprep.subr.mxu0 0.0
    %382 = vmatpush2.xpose.msra.mxu0 0.0
    %383 = vmatprep.subr.mxu0 0.0
    %384 = vmatpush2.xpose.msra.mxu0 0.0
    %385 = vmatprep.subr.mxu0 0.0
    %386 = vmatpush2.xpose.msra.mxu0 0.0
    %387 = vmatprep.subr.mxu0 0.0
    %388 = vmatpush2.xpose.msra.mxu0 0.0
    %389 = vmatprep.subr.mxu0 0.0
    %390 = vmatpush2.xpose.msra.mxu0 0.0
    %391 = vmatprep.subr.mxu0 0.0
    %392 = vmatpush2.xpose.msra.mxu0 0.0
    %393 = vmatprep.subr.mxu0 0.0
    %394 = vmatpush2.xpose.msra.mxu0 0.0
    %395 = vmatprep.subr.mxu0 0.0
    %396 = vmatpush2.xpose.msra.mxu0 0.0
    %397 = vmatprep.mubr.f32.mxu0 0.0
    %398 = vmatmul.mubr.f32.gmra.mxu0 %v329
    %v399 = vpop.f32.mrf.mxu0
    %v400 = vadd.f32 0.0, %v399
    %v401 = vpop.f32.mrf.mxu0
    %402 = vdwg.mxu0
    %v403 = vmul.f32 %v400, 0.35355338
    %v404 = vsel %vm161, %v403, -inf
    %405 = vmax.xlane.f32.xlu0 %v404
    %v406 = vpop.xlane.xlu0 %405
    %v407 = vsub.f32 %v403, %v406
    %v408 = vmul.f32 %v407, 1.442695
    %v409 = vpow.pop %v408
    %v410 = vsel %vm161, %v409, 0.0
    %411 = vadd.xlane.f32.xlu0 %v410
    %v412 = vpop.xlane.xlu0 %411
    %v413 = vrcp.pop %v412
    %v414 = vmul.f32 %v409, %v413
    %415 = vrot.lane.b32.xlu0 %v149, 56
    %v416 = vpop.permute.xlu0 %415
    %v419 = vsel %vm161, %v414, 0
    %421 = vmatprep.subr.mxu0 0.0
    %422 = vmatpush1.msra.mxu0 0.0
    %423 = vmatprep.subr.mxu0 0.0
    %424 = vmatpush1.msra.mxu0 0.0
    %425 = vmatprep.subr.mxu0 0.0
    %426 = vmatpush1.msra.mxu0 0.0
    %427 = vmatprep.subr.mxu0 0.0
    %428 = vmatpush1.msra.mxu0 0.0
    %429 = vmatprep.subr.mxu0 0.0
    %430 = vmatpush1.msra.mxu0 0.0
    %431 = vmatprep.subr.mxu0 0.0
    %432 = vmatpush1.msra.mxu0 0.0
    %433 = vmatprep.subr.mxu0 0.0
    %434 = vmatpush1.msra.mxu0 0.0
    %435 = vmatprep.subr.mxu0 0.0
    %436 = vmatpush1.msra.mxu0 0.0
    %437 = vmatprep.subr.mxu0 0.0
    %438 = vmatpush1.msra.mxu0 0.0
    %439 = vmatprep.subr.mxu0 0.0
    %440 = vmatpush1.msra.mxu0 0.0
    %441 = vmatprep.subr.mxu0 0.0
    %442 = vmatpush1.msra.mxu0 0.0
    %443 = vmatprep.subr.mxu0 0.0
    %444 = vmatpush1.msra.mxu0 0.0
    %445 = vmatprep.subr.mxu0 0.0
    %446 = vmatpush1.msra.mxu0 0.0
    %447 = vmatprep.subr.mxu0 0.0
    %448 = vmatpush1.msra.mxu0 0.0
    %449 = vmatprep.subr.mxu0 0.0
    %450 = vmatpush1.msra.mxu0 0.0
    %451 = vmatprep.subr.mxu0 0.0
    %452 = vmatpush1.msra.mxu0 %v416
    %453 = vmatprep.subr.mxu0 0.0
    %454 = vmatpush2.msra.mxu0 0.0
    %455 = vmatprep.subr.mxu0 0.0
    %456 = vmatpush2.msra.mxu0 0.0
    %457 = vmatprep.subr.mxu0 0.0
    %458 = vmatpush2.msra.mxu0 0.0
    %459 = vmatprep.subr.mxu0 0.0
    %460 = vmatpush2.msra.mxu0 0.0
    %461 = vmatprep.subr.mxu0 0.0
    %462 = vmatpush2.msra.mxu0 0.0
    %463 = vmatprep.subr.mxu0 0.0
    %464 = vmatpush2.msra.mxu0 0.0
    %465 = vmatprep.subr.mxu0 0.0
    %466 = vmatpush2.msra.mxu0 0.0
    %467 = vmatprep.subr.mxu0 0.0
    %468 = vmatpush2.msra.mxu0 0.0
    %469 = vmatprep.subr.mxu0 0.0
    %470 = vmatpush2.msra.mxu0 0.0
    %471 = vmatprep.subr.mxu0 0.0
    %472 = vmatpush2.msra.mxu0 0.0
    %473 = vmatprep.subr.mxu0 0.0
    %474 = vmatpush2.msra.mxu0 0.0
    %475 = vmatprep.subr.mxu0 0.0
    %476 = vmatpush2.msra.mxu0 0.0
    %477 = vmatprep.subr.mxu0 0.0
    %478 = vmatpush2.msra.mxu0 0.0
    %479 = vmatprep.subr.mxu0 0.0
    %480 = vmatpush2.msra.mxu0 0.0
    %481 = vmatprep.subr.mxu0 0.0
    %482 = vmatpush2.msra.mxu0 0.0
    %483 = vmatprep.subr.mxu0 0.0
    %484 = vmatpush2.msra.mxu0 0.0
    %485 = vmatprep.mubr.f32.mxu0 0.0
    %486 = vmatmul.mubr.f32.gmra.mxu0 %v419
    %v487 = vpop.f32.mrf.mxu0
    %v488 = vadd.f32 0.0, %v487
    %v489 = vpop.f32.mrf.mxu0
    %490 = vdwg.mxu0
    %v491 = vld [vmem:[#allocation7 + $0x8] sm:$0xff]
    %v493 = vsel %vm161, %v488, 0
    %495 = vmatprep.subr.mxu0 0.0
    %496 = vmatpush1.msra.mxu0 0.0
    %497 = vmatprep.subr.mxu0 0.0
    %498 = vmatpush1.msra.mxu0 0.0
    %499 = vmatprep.subr.mxu0 0.0
    %500 = vmatpush1.msra.mxu0 0.0
    %501 = vmatprep.subr.mxu0 0.0
    %502 = vmatpush1.msra.mxu0 0.0
    %503 = vmatprep.subr.mxu0 0.0
    %504 = vmatpush1.msra.mxu0 0.0
    %505 = vmatprep.subr.mxu0 0.0
    %506 = vmatpush1.msra.mxu0 0.0
    %507 = vmatprep.subr.mxu0 0.0
    %508 = vmatpush1.msra.mxu0 0.0
    %509 = vmatprep.subr.mxu0 0.0
    %510 = vmatpush1.msra.mxu0 0.0
    %511 = vmatprep.subr.mxu0 0.0
    %512 = vmatpush1.msra.mxu0 0.0
    %513 = vmatprep.subr.mxu0 0.0
    %514 = vmatpush1.msra.mxu0 0.0
    %515 = vmatprep.subr.mxu0 0.0
    %516 = vmatpush1.msra.mxu0 0.0
    %517 = vmatprep.subr.mxu0 0.0
    %518 = vmatpush1.msra.mxu0 0.0
    %519 = vmatprep.subr.mxu0 0.0
    %520 = vmatpush1.msra.mxu0 0.0
    %521 = vmatprep.subr.mxu0 0.0
    %522 = vmatpush1.msra.mxu0 0.0
    %523 = vmatprep.subr.mxu0 0.0
    %524 = vmatpush1.msra.mxu0 0.0
    %525 = vmatprep.subr.mxu0 0.0
    %526 = vmatpush1.msra.mxu0 %v491
    %527 = vmatprep.subr.mxu0 0.0
    %528 = vmatpush2.msra.mxu0 0.0
    %529 = vmatprep.subr.mxu0 0.0
    %530 = vmatpush2.msra.mxu0 0.0
    %531 = vmatprep.subr.mxu0 0.0
    %532 = vmatpush2.msra.mxu0 0.0
    %533 = vmatprep.subr.mxu0 0.0
    %534 = vmatpush2.msra.mxu0 0.0
    %535 = vmatprep.subr.mxu0 0.0
    %536 = vmatpush2.msra.mxu0 0.0
    %537 = vmatprep.subr.mxu0 0.0
    %538 = vmatpush2.msra.mxu0 0.0
    %539 = vmatprep.subr.mxu0 0.0
    %540 = vmatpush2.msra.mxu0 0.0
    %541 = vmatprep.subr.mxu0 0.0
    %542 = vmatpush2.msra.mxu0 0.0
    %543 = vmatprep.subr.mxu0 0.0
    %544 = vmatpush2.msra.mxu0 0.0
    %545 = vmatprep.subr.mxu0 0.0
    %546 = vmatpush2.msra.mxu0 0.0
    %547 = vmatprep.subr.mxu0 0.0
    %548 = vmatpush2.msra.mxu0 0.0
    %549 = vmatprep.subr.mxu0 0.0
    %550 = vmatpush2.msra.mxu0 0.0
    %551 = vmatprep.subr.mxu0 0.0
    %552 = vmatpush2.msra.mxu0 0.0
    %553 = vmatprep.subr.mxu0 0.0
    %554 = vmatpush2.msra.mxu0 0.0
    %555 = vmatprep.subr.mxu0 0.0
    %556 = vmatpush2.msra.mxu0 0.0
    %557 = vmatprep.subr.mxu0 0.0
    %558 = vmatpush2.msra.mxu0 0.0
    %559 = vmatprep.mubr.f32.mxu0 0.0
    %560 = vmatmul.mubr.f32.gmra.mxu0 %v493
    %v561 = vpop.f32.mrf.mxu0
    %v562 = vadd.f32 0.0, %v561
    %v563 = vpop.f32.mrf.mxu0
    %564 = vdwg.mxu0
    %v566 = vsel %vm161, %v321, 0
    %568 = vmatprep.subr.mxu0 0.0
    %569 = vmatpush1.msra.mxu0 0.0
    %570 = vmatprep.subr.mxu0 0.0
    %571 = vmatpush1.msra.mxu0 0.0
    %572 = vmatprep.subr.mxu0 0.0
    %573 = vmatpush1.msra.mxu0 0.0
    %574 = vmatprep.subr.mxu0 0.0
    %575 = vmatpush1.msra.mxu0 0.0
    %576 = vmatprep.subr.mxu0 0.0
    %577 = vmatpush1.msra.mxu0 0.0
    %578 = vmatprep.subr.mxu0 0.0
    %579 = vmatpush1.msra.mxu0 0.0
    %580 = vmatprep.subr.mxu0 0.0
    %581 = vmatpush1.msra.mxu0 0.0
    %582 = vmatprep.subr.mxu0 0.0
    %583 = vmatpush1.msra.mxu0 0.0
    %584 = vmatprep.subr.mxu0 0.0
    %585 = vmatpush1.msra.mxu0 0.0
    %586 = vmatprep.subr.mxu0 0.0
    %587 = vmatpush1.msra.mxu0 0.0
    %588 = vmatprep.subr.mxu0 0.0
    %589 = vmatpush1.msra.mxu0 0.0
    %590 = vmatprep.subr.mxu0 0.0
    %591 = vmatpush1.msra.mxu0 0.0
    %592 = vmatprep.subr.mxu0 0.0
    %593 = vmatpush1.msra.mxu0 0.0
    %594 = vmatprep.subr.mxu0 0.0
    %595 = vmatpush1.msra.mxu0 0.0
    %596 = vmatprep.subr.mxu0 0.0
    %597 = vmatpush1.msra.mxu0 0.0
    %598 = vmatprep.subr.mxu0 0.0
    %599 = vmatpush1.msra.mxu0 %v324
    %600 = vmatprep.subr.mxu0 0.0
    %601 = vmatpush2.msra.mxu0 0.0
    %602 = vmatprep.subr.mxu0 0.0
    %603 = vmatpush2.msra.mxu0 0.0
    %604 = vmatprep.subr.mxu0 0.0
    %605 = vmatpush2.msra.mxu0 0.0
    %606 = vmatprep.subr.mxu0 0.0
    %607 = vmatpush2.msra.mxu0 0.0
    %608 = vmatprep.subr.mxu0 0.0
    %609 = vmatpush2.msra.mxu0 0.0
    %610 = vmatprep.subr.mxu0 0.0
    %611 = vmatpush2.msra.mxu0 0.0
    %612 = vmatprep.subr.mxu0 0.0
    %613 = vmatpush2.msra.mxu0 0.0
    %614 = vmatprep.subr.mxu0 0.0
    %615 = vmatpush2.msra.mxu0 0.0
    %616 = vmatprep.subr.mxu0 0.0
    %617 = vmatpush2.msra.mxu0 0.0
    %618 = vmatprep.subr.mxu0 0.0
    %619 = vmatpush2.msra.mxu0 0.0
    %620 = vmatprep.subr.mxu0 0.0
    %621 = vmatpush2.msra.mxu0 0.0
    %622 = vmatprep.subr.mxu0 0.0
    %623 = vmatpush2.msra.mxu0 0.0
    %624 = vmatprep.subr.mxu0 0.0
    %625 = vmatpush2.msra.mxu0 0.0
    %626 = vmatprep.subr.mxu0 0.0
    %627 = vmatpush2.msra.mxu0 0.0
    %628 = vmatprep.subr.mxu0 0.0
    %629 = vmatpush2.msra.mxu0 0.0
    %630 = vmatprep.subr.mxu0 0.0
    %631 = vmatpush2.msra.mxu0 0.0
    %632 = vmatprep.mubr.f32.mxu0 0.0
    %633 = vmatmul.mubr.f32.gmra.mxu0 %v566
    %v634 = vpop.f32.mrf.mxu0
    %v635 = vadd.f32 %v562, %v634
    %v636 = vpop.f32.mrf.mxu0
    %637 = vdwg.mxu0
    %638 = vrot.lane.b32.xlu0 %v149, 112
    %v639 = vpop.permute.xlu0 %638
    %640 = vrot.lane.b32.xlu0 %v149, 80
    %v641 = vpop.permute.xlu0 %640
    %v642 = vsel %vm161, %v639, 0
    %v644 = vsel %vm161, %v641, 0
    %646 = vmatprep.subr.mxu0 0.0
    %647 = vmatpush1.xpose.msra.mxu0 0.0
    %648 = vmatprep.subr.mxu0 0.0
    %649 = vmatpush1.xpose.msra.mxu0 0.0
    %650 = vmatprep.subr.mxu0 0.0
    %651 = vmatpush1.xpose.msra.mxu0 0.0
    %652 = vmatprep.subr.mxu0 0.0
    %653 = vmatpush1.xpose.msra.mxu0 0.0
    %654 = vmatprep.subr.mxu0 0.0
    %655 = vmatpush1.xpose.msra.mxu0 0.0
    %656 = vmatprep.subr.mxu0 0.0
    %657 = vmatpush1.xpose.msra.mxu0 0.0
    %658 = vmatprep.subr.mxu0 0.0
    %659 = vmatpush1.xpose.msra.mxu0 0.0
    %660 = vmatprep.subr.mxu0 0.0
    %661 = vmatpush1.xpose.msra.mxu0 0.0
    %662 = vmatprep.subr.mxu0 0.0
    %663 = vmatpush1.xpose.msra.mxu0 0.0
    %664 = vmatprep.subr.mxu0 0.0
    %665 = vmatpush1.xpose.msra.mxu0 0.0
    %666 = vmatprep.subr.mxu0 0.0
    %667 = vmatpush1.xpose.msra.mxu0 0.0
    %668 = vmatprep.subr.mxu0 0.0
    %669 = vmatpush1.xpose.msra.mxu0 0.0
    %670 = vmatprep.subr.mxu0 0.0
    %671 = vmatpush1.xpose.msra.mxu0 0.0
    %672 = vmatprep.subr.mxu0 0.0
    %673 = vmatpush1.xpose.msra.mxu0 0.0
    %674 = vmatprep.subr.mxu0 0.0
    %675 = vmatpush1.xpose.msra.mxu0 0.0
    %676 = vmatprep.subr.mxu0 0.0
    %677 = vmatpush1.xpose.msra.mxu0 %v644
    %678 = vmatprep.subr.mxu0 0.0
    %679 = vmatpush2.xpose.msra.mxu0 0.0
    %680 = vmatprep.subr.mxu0 0.0
    %681 = vmatpush2.xpose.msra.mxu0 0.0
    %682 = vmatprep.subr.mxu0 0.0
    %683 = vmatpush2.xpose.msra.mxu0 0.0
    %684 = vmatprep.subr.mxu0 0.0
    %685 = vmatpush2.xpose.msra.mxu0 0.0
    %686 = vmatprep.subr.mxu0 0.0
    %687 = vmatpush2.xpose.msra.mxu0 0.0
    %688 = vmatprep.subr.mxu0 0.0
    %689 = vmatpush2.xpose.msra.mxu0 0.0
    %690 = vmatprep.subr.mxu0 0.0
    %691 = vmatpush2.xpose.msra.mxu0 0.0
    %692 = vmatprep.subr.mxu0 0.0
    %693 = vmatpush2.xpose.msra.mxu0 0.0
    %694 = vmatprep.subr.mxu0 0.0
    %695 = vmatpush2.xpose.msra.mxu0 0.0
    %696 = vmatprep.subr.mxu0 0.0
    %697 = vmatpush2.xpose.msra.mxu0 0.0
    %698 = vmatprep.subr.mxu0 0.0
    %699 = vmatpush2.xpose.msra.mxu0 0.0
    %700 = vmatprep.subr.mxu0 0.0
    %701 = vmatpush2.xpose.msra.mxu0 0.0
    %702 = vmatprep.subr.mxu0 0.0
    %703 = vmatpush2.xpose.msra.mxu0 0.0
    %704 = vmatprep.subr.mxu0 0.0
    %705 = vmatpush2.xpose.msra.mxu0 0.0
    %706 = vmatprep.subr.mxu0 0.0
    %707 = vmatpush2.xpose.msra.mxu0 0.0
    %708 = vmatprep.subr.mxu0 0.0
    %709 = vmatpush2.xpose.msra.mxu0 0.0
    %710 = vmatprep.mubr.f32.mxu0 0.0
    %711 = vmatmul.mubr.f32.gmra.mxu0 %v642
    %v712 = vpop.f32.mrf.mxu0
    %v713 = vadd.f32 0.0, %v712
    %v714 = vpop.f32.mrf.mxu0
    %715 = vdwg.mxu0
    %v716 = vmul.f32 %v713, 0.35355338
    %v717 = vsel %vm161, %v716, -inf
    %718 = vmax.xlane.f32.xlu0 %v717
    %v719 = vpop.xlane.xlu0 %718
    %v720 = vsub.f32 %v716, %v719
    %v721 = vmul.f32 %v720, 1.442695
    %v722 = vpow.pop %v721
    %v723 = vsel %vm161, %v722, 0.0
    %724 = vadd.xlane.f32.xlu0 %v723
    %v725 = vpop.xlane.xlu0 %724
    %v726 = vrcp.pop %v725
    %v727 = vmul.f32 %v722, %v726
    %728 = vrot.lane.b32.xlu0 %v149, 48
    %v729 = vpop.permute.xlu0 %728
    %v732 = vsel %vm161, %v727, 0
    %734 = vmatprep.subr.mxu0 0.0
    %735 = vmatpush1.msra.mxu0 0.0
    %736 = vmatprep.subr.mxu0 0.0
    %737 = vmatpush1.msra.mxu0 0.0
    %738 = vmatprep.subr.mxu0 0.0
    %739 = vmatpush1.msra.mxu0 0.0
    %740 = vmatprep.subr.mxu0 0.0
    %741 = vmatpush1.msra.mxu0 0.0
    %742 = vmatprep.subr.mxu0 0.0
    %743 = vmatpush1.msra.mxu0 0.0
    %744 = vmatprep.subr.mxu0 0.0
    %745 = vmatpush1.msra.mxu0 0.0
    %746 = vmatprep.subr.mxu0 0.0
    %747 = vmatpush1.msra.mxu0 0.0
    %748 = vmatprep.subr.mxu0 0.0
    %749 = vmatpush1.msra.mxu0 0.0
    %750 = vmatprep.subr.mxu0 0.0
    %751 = vmatpush1.msra.mxu0 0.0
    %752 = vmatprep.subr.mxu0 0.0
    %753 = vmatpush1.msra.mxu0 0.0
    %754 = vmatprep.subr.mxu0 0.0
    %755 = vmatpush1.msra.mxu0 0.0
    %756 = vmatprep.subr.mxu0 0.0
    %757 = vmatpush1.msra.mxu0 0.0
    %758 = vmatprep.subr.mxu0 0.0
    %759 = vmatpush1.msra.mxu0 0.0
    %760 = vmatprep.subr.mxu0 0.0
    %761 = vmatpush1.msra.mxu0 0.0
    %762 = vmatprep.subr.mxu0 0.0
    %763 = vmatpush1.msra.mxu0 0.0
    %764 = vmatprep.subr.mxu0 0.0
    %765 = vmatpush1.msra.mxu0 %v729
    %766 = vmatprep.subr.mxu0 0.0
    %767 = vmatpush2.msra.mxu0 0.0
    %768 = vmatprep.subr.mxu0 0.0
    %769 = vmatpush2.msra.mxu0 0.0
    %770 = vmatprep.subr.mxu0 0.0
    %771 = vmatpush2.msra.mxu0 0.0
    %772 = vmatprep.subr.mxu0 0.0
    %773 = vmatpush2.msra.mxu0 0.0
    %774 = vmatprep.subr.mxu0 0.0
    %775 = vmatpush2.msra.mxu0 0.0
    %776 = vmatprep.subr.mxu0 0.0
    %777 = vmatpush2.msra.mxu0 0.0
    %778 = vmatprep.subr.mxu0 0.0
    %779 = vmatpush2.msra.mxu0 0.0
    %780 = vmatprep.subr.mxu0 0.0
    %781 = vmatpush2.msra.mxu0 0.0
    %782 = vmatprep.subr.mxu0 0.0
    %783 = vmatpush2.msra.mxu0 0.0
    %784 = vmatprep.subr.mxu0 0.0
    %785 = vmatpush2.msra.mxu0 0.0
    %786 = vmatprep.subr.mxu0 0.0
    %787 = vmatpush2.msra.mxu0 0.0
    %788 = vmatprep.subr.mxu0 0.0
    %789 = vmatpush2.msra.mxu0 0.0
    %790 = vmatprep.subr.mxu0 0.0
    %791 = vmatpush2.msra.mxu0 0.0
    %792 = vmatprep.subr.mxu0 0.0
    %793 = vmatpush2.msra.mxu0 0.0
    %794 = vmatprep.subr.mxu0 0.0
    %795 = vmatpush2.msra.mxu0 0.0
    %796 = vmatprep.subr.mxu0 0.0
    %797 = vmatpush2.msra.mxu0 0.0
    %798 = vmatprep.mubr.f32.mxu0 0.0
    %799 = vmatmul.mubr.f32.gmra.mxu0 %v732
    %v800 = vpop.f32.mrf.mxu0
    %v801 = vadd.f32 0.0, %v800
    %v802 = vpop.f32.mrf.mxu0
    %803 = vdwg.mxu0
    %v804 = vld [vmem:[#allocation7 + $0x10] sm:$0xff]
    %v806 = vsel %vm161, %v801, 0
    %808 = vmatprep.subr.mxu0 0.0
    %809 = vmatpush1.msra.mxu0 0.0
    %810 = vmatprep.subr.mxu0 0.0
    %811 = vmatpush1.msra.mxu0 0.0
    %812 = vmatprep.subr.mxu0 0.0
    %813 = vmatpush1.msra.mxu0 0.0
    %814 = vmatprep.subr.mxu0 0.0
    %815 = vmatpush1.msra.mxu0 0.0
    %816 = vmatprep.subr.mxu0 0.0
    %817 = vmatpush1.msra.mxu0 0.0
    %818 = vmatprep.subr.mxu0 0.0
    %819 = vmatpush1.msra.mxu0 0.0
    %820 = vmatprep.subr.mxu0 0.0
    %821 = vmatpush1.msra.mxu0 0.0
    %822 = vmatprep.subr.mxu0 0.0
    %823 = vmatpush1.msra.mxu0 0.0
    %824 = vmatprep.subr.mxu0 0.0
    %825 = vmatpush1.msra.mxu0 0.0
    %826 = vmatprep.subr.mxu0 0.0
    %827 = vmatpush1.msra.mxu0 0.0
    %828 = vmatprep.subr.mxu0 0.0
    %829 = vmatpush1.msra.mxu0 0.0
    %830 = vmatprep.subr.mxu0 0.0
    %831 = vmatpush1.msra.mxu0 0.0
    %832 = vmatprep.subr.mxu0 0.0
    %833 = vmatpush1.msra.mxu0 0.0
    %834 = vmatprep.subr.mxu0 0.0
    %835 = vmatpush1.msra.mxu0 0.0
    %836 = vmatprep.subr.mxu0 0.0
    %837 = vmatpush1.msra.mxu0 0.0
    %838 = vmatprep.subr.mxu0 0.0
    %839 = vmatpush1.msra.mxu0 %v804
    %840 = vmatprep.subr.mxu0 0.0
    %841 = vmatpush2.msra.mxu0 0.0
    %842 = vmatprep.subr.mxu0 0.0
    %843 = vmatpush2.msra.mxu0 0.0
    %844 = vmatprep.subr.mxu0 0.0
    %845 = vmatpush2.msra.mxu0 0.0
    %846 = vmatprep.subr.mxu0 0.0
    %847 = vmatpush2.msra.mxu0 0.0
    %848 = vmatprep.subr.mxu0 0.0
    %849 = vmatpush2.msra.mxu0 0.0
    %850 = vmatprep.subr.mxu0 0.0
    %851 = vmatpush2.msra.mxu0 0.0
    %852 = vmatprep.subr.mxu0 0.0
    %853 = vmatpush2.msra.mxu0 0.0
    %854 = vmatprep.subr.mxu0 0.0
    %855 = vmatpush2.msra.mxu0 0.0
    %856 = vmatprep.subr.mxu0 0.0
    %857 = vmatpush2.msra.mxu0 0.0
    %858 = vmatprep.subr.mxu0 0.0
    %859 = vmatpush2.msra.mxu0 0.0
    %860 = vmatprep.subr.mxu0 0.0
    %861 = vmatpush2.msra.mxu0 0.0
    %862 = vmatprep.subr.mxu0 0.0
    %863 = vmatpush2.msra.mxu0 0.0
    %864 = vmatprep.subr.mxu0 0.0
    %865 = vmatpush2.msra.mxu0 0.0
    %866 = vmatprep.subr.mxu0 0.0
    %867 = vmatpush2.msra.mxu0 0.0
    %868 = vmatprep.subr.mxu0 0.0
    %869 = vmatpush2.msra.mxu0 0.0
    %870 = vmatprep.subr.mxu0 0.0
    %871 = vmatpush2.msra.mxu0 0.0
    %872 = vmatprep.mubr.f32.mxu0 0.0
    %873 = vmatmul.mubr.f32.gmra.mxu0 %v806
    %v874 = vpop.f32.mrf.mxu0
    %v875 = vadd.f32 0.0, %v874
    %v876 = vpop.f32.mrf.mxu0
    %877 = vdwg.mxu0
    %v878 = vadd.f32 %v635, %v875
    %879 = vrot.lane.b32.xlu0 %v149, 104
    %v880 = vpop.permute.xlu0 %879
    %881 = vrot.lane.b32.xlu0 %v149, 72
    %v882 = vpop.permute.xlu0 %881
    %v883 = vsel %vm161, %v880, 0
    %v885 = vsel %vm161, %v882, 0
    %887 = vmatprep.subr.mxu0 0.0
    %888 = vmatpush1.xpose.msra.mxu0 0.0
    %889 = vmatprep.subr.mxu0 0.0
    %890 = vmatpush1.xpose.msra.mxu0 0.0
    %891 = vmatprep.subr.mxu0 0.0
    %892 = vmatpush1.xpose.msra.mxu0 0.0
    %893 = vmatprep.subr.mxu0 0.0
    %894 = vmatpush1.xpose.msra.mxu0 0.0
    %895 = vmatprep.subr.mxu0 0.0
    %896 = vmatpush1.xpose.msra.mxu0 0.0
    %897 = vmatprep.subr.mxu0 0.0
    %898 = vmatpush1.xpose.msra.mxu0 0.0
    %899 = vmatprep.subr.mxu0 0.0
    %900 = vmatpush1.xpose.msra.mxu0 0.0
    %901 = vmatprep.subr.mxu0 0.0
    %902 = vmatpush1.xpose.msra.mxu0 0.0
    %903 = vmatprep.subr.mxu0 0.0
    %904 = vmatpush1.xpose.msra.mxu0 0.0
    %905 = vmatprep.subr.mxu0 0.0
    %906 = vmatpush1.xpose.msra.mxu0 0.0
    %907 = vmatprep.subr.mxu0 0.0
    %908 = vmatpush1.xpose.msra.mxu0 0.0
    %909 = vmatprep.subr.mxu0 0.0
    %910 = vmatpush1.xpose.msra.mxu0 0.0
    %911 = vmatprep.subr.mxu0 0.0
    %912 = vmatpush1.xpose.msra.mxu0 0.0
    %913 = vmatprep.subr.mxu0 0.0
    %914 = vmatpush1.xpose.msra.mxu0 0.0
    %915 = vmatprep.subr.mxu0 0.0
    %916 = vmatpush1.xpose.msra.mxu0 0.0
    %917 = vmatprep.subr.mxu0 0.0
    %918 = vmatpush1.xpose.msra.mxu0 %v885
    %919 = vmatprep.subr.mxu0 0.0
    %920 = vmatpush2.xpose.msra.mxu0 0.0
    %921 = vmatprep.subr.mxu0 0.0
    %922 = vmatpush2.xpose.msra.mxu0 0.0
    %923 = vmatprep.subr.mxu0 0.0
    %924 = vmatpush2.xpose.msra.mxu0 0.0
    %925 = vmatprep.subr.mxu0 0.0
    %926 = vmatpush2.xpose.msra.mxu0 0.0
    %927 = vmatprep.subr.mxu0 0.0
    %928 = vmatpush2.xpose.msra.mxu0 0.0
    %929 = vmatprep.subr.mxu0 0.0
    %930 = vmatpush2.xpose.msra.mxu0 0.0
    %931 = vmatprep.subr.mxu0 0.0
    %932 = vmatpush2.xpose.msra.mxu0 0.0
    %933 = vmatprep.subr.mxu0 0.0
    %934 = vmatpush2.xpose.msra.mxu0 0.0
    %935 = vmatprep.subr.mxu0 0.0
    %936 = vmatpush2.xpose.msra.mxu0 0.0
    %937 = vmatprep.subr.mxu0 0.0
    %938 = vmatpush2.xpose.msra.mxu0 0.0
    %939 = vmatprep.subr.mxu0 0.0
    %940 = vmatpush2.xpose.msra.mxu0 0.0
    %941 = vmatprep.subr.mxu0 0.0
    %942 = vmatpush2.xpose.msra.mxu0 0.0
    %943 = vmatprep.subr.mxu0 0.0
    %944 = vmatpush2.xpose.msra.mxu0 0.0
    %945 = vmatprep.subr.mxu0 0.0
    %946 = vmatpush2.xpose.msra.mxu0 0.0
    %947 = vmatprep.subr.mxu0 0.0
    %948 = vmatpush2.xpose.msra.mxu0 0.0
    %949 = vmatprep.subr.mxu0 0.0
    %950 = vmatpush2.xpose.msra.mxu0 0.0
    %951 = vmatprep.mubr.f32.mxu0 0.0
    %952 = vmatmul.mubr.f32.gmra.mxu0 %v883
    %v953 = vpop.f32.mrf.mxu0
    %v954 = vadd.f32 0.0, %v953
    %v955 = vpop.f32.mrf.mxu0
    %956 = vdwg.mxu0
    %v957 = vmul.f32 %v954, 0.35355338
    %v958 = vsel %vm161, %v957, -inf
    %959 = vmax.xlane.f32.xlu0 %v958
    %v960 = vpop.xlane.xlu0 %959
    %v961 = vsub.f32 %v957, %v960
    %v962 = vmul.f32 %v961, 1.442695
    %v963 = vpow.pop %v962
    %v964 = vsel %vm161, %v963, 0.0
    %965 = vadd.xlane.f32.xlu0 %v964
    %v966 = vpop.xlane.xlu0 %965
    %v967 = vrcp.pop %v966
    %v968 = vmul.f32 %v963, %v967
    %969 = vrot.lane.b32.xlu0 %v149, 40
    %v970 = vpop.permute.xlu0 %969
    %v973 = vsel %vm161, %v968, 0
    %975 = vmatprep.subr.mxu0 0.0
    %976 = vmatpush1.msra.mxu0 0.0
    %977 = vmatprep.subr.mxu0 0.0
    %978 = vmatpush1.msra.mxu0 0.0
    %979 = vmatprep.subr.mxu0 0.0
    %980 = vmatpush1.msra.mxu0 0.0
    %981 = vmatprep.subr.mxu0 0.0
    %982 = vmatpush1.msra.mxu0 0.0
    %983 = vmatprep.subr.mxu0 0.0
    %984 = vmatpush1.msra.mxu0 0.0
    %985 = vmatprep.subr.mxu0 0.0
    %986 = vmatpush1.msra.mxu0 0.0
    %987 = vmatprep.subr.mxu0 0.0
    %988 = vmatpush1.msra.mxu0 0.0
    %989 = vmatprep.subr.mxu0 0.0
    %990 = vmatpush1.msra.mxu0 0.0
    %991 = vmatprep.subr.mxu0 0.0
    %992 = vmatpush1.msra.mxu0 0.0
    %993 = vmatprep.subr.mxu0 0.0
    %994 = vmatpush1.msra.mxu0 0.0
    %995 = vmatprep.subr.mxu0 0.0
    %996 = vmatpush1.msra.mxu0 0.0
    %997 = vmatprep.subr.mxu0 0.0
    %998 = vmatpush1.msra.mxu0 0.0
    %999 = vmatprep.subr.mxu0 0.0
    %1000 = vmatpush1.msra.mxu0 0.0
    %1001 = vmatprep.subr.mxu0 0.0
    %1002 = vmatpush1.msra.mxu0 0.0
    %1003 = vmatprep.subr.mxu0 0.0
    %1004 = vmatpush1.msra.mxu0 0.0
    %1005 = vmatprep.subr.mxu0 0.0
    %1006 = vmatpush1.msra.mxu0 %v970
    %1007 = vmatprep.subr.mxu0 0.0
    %1008 = vmatpush2.msra.mxu0 0.0
    %1009 = vmatprep.subr.mxu0 0.0
    %1010 = vmatpush2.msra.mxu0 0.0
    %1011 = vmatprep.subr.mxu0 0.0
    %1012 = vmatpush2.msra.mxu0 0.0
    %1013 = vmatprep.subr.mxu0 0.0
    %1014 = vmatpush2.msra.mxu0 0.0
    %1015 = vmatprep.subr.mxu0 0.0
    %1016 = vmatpush2.msra.mxu0 0.0
    %1017 = vmatprep.subr.mxu0 0.0
    %1018 = vmatpush2.msra.mxu0 0.0
    %1019 = vmatprep.subr.mxu0 0.0
    %1020 = vmatpush2.msra.mxu0 0.0
    %1021 = vmatprep.subr.mxu0 0.0
    %1022 = vmatpush2.msra.mxu0 0.0
    %1023 = vmatprep.subr.mxu0 0.0
    %1024 = vmatpush2.msra.mxu0 0.0
    %1025 = vmatprep.subr.mxu0 0.0
    %1026 = vmatpush2.msra.mxu0 0.0
    %1027 = vmatprep.subr.mxu0 0.0
    %1028 = vmatpush2.msra.mxu0 0.0
    %1029 = vmatprep.subr.mxu0 0.0
    %1030 = vmatpush2.msra.mxu0 0.0
    %1031 = vmatprep.subr.mxu0 0.0
    %1032 = vmatpush2.msra.mxu0 0.0
    %1033 = vmatprep.subr.mxu0 0.0
    %1034 = vmatpush2.msra.mxu0 0.0
    %1035 = vmatprep.subr.mxu0 0.0
    %1036 = vmatpush2.msra.mxu0 0.0
    %1037 = vmatprep.subr.mxu0 0.0
    %1038 = vmatpush2.msra.mxu0 0.0
    %1039 = vmatprep.mubr.f32.mxu0 0.0
    %1040 = vmatmul.mubr.f32.gmra.mxu0 %v973
    %v1041 = vpop.f32.mrf.mxu0
    %v1042 = vadd.f32 0.0, %v1041
    %v1043 = vpop.f32.mrf.mxu0
    %1044 = vdwg.mxu0
    %v1045 = vld [vmem:[#allocation7 + $0x18] sm:$0xff]
    %v1047 = vsel %vm161, %v1042, 0
    %1049 = vmatprep.subr.mxu0 0.0
    %1050 = vmatpush1.msra.mxu0 0.0
    %1051 = vmatprep.subr.mxu0 0.0
    %1052 = vmatpush1.msra.mxu0 0.0
    %1053 = vmatprep.subr.mxu0 0.0
    %1054 = vmatpush1.msra.mxu0 0.0
    %1055 = vmatprep.subr.mxu0 0.0
    %1056 = vmatpush1.msra.mxu0 0.0
    %1057 = vmatprep.subr.mxu0 0.0
    %1058 = vmatpush1.msra.mxu0 0.0
    %1059 = vmatprep.subr.mxu0 0.0
    %1060 = vmatpush1.msra.mxu0 0.0
    %1061 = vmatprep.subr.mxu0 0.0
    %1062 = vmatpush1.msra.mxu0 0.0
    %1063 = vmatprep.subr.mxu0 0.0
    %1064 = vmatpush1.msra.mxu0 0.0
    %1065 = vmatprep.subr.mxu0 0.0
    %1066 = vmatpush1.msra.mxu0 0.0
    %1067 = vmatprep.subr.mxu0 0.0
    %1068 = vmatpush1.msra.mxu0 0.0
    %1069 = vmatprep.subr.mxu0 0.0
    %1070 = vmatpush1.msra.mxu0 0.0
    %1071 = vmatprep.subr.mxu0 0.0
    %1072 = vmatpush1.msra.mxu0 0.0
    %1073 = vmatprep.subr.mxu0 0.0
    %1074 = vmatpush1.msra.mxu0 0.0
    %1075 = vmatprep.subr.mxu0 0.0
    %1076 = vmatpush1.msra.mxu0 0.0
    %1077 = vmatprep.subr.mxu0 0.0
    %1078 = vmatpush1.msra.mxu0 0.0
    %1079 = vmatprep.subr.mxu0 0.0
    %1080 = vmatpush1.msra.mxu0 %v1045
    %1081 = vmatprep.subr.mxu0 0.0
    %1082 = vmatpush2.msra.mxu0 0.0
    %1083 = vmatprep.subr.mxu0 0.0
    %1084 = vmatpush2.msra.mxu0 0.0
    %1085 = vmatprep.subr.mxu0 0.0
    %1086 = vmatpush2.msra.mxu0 0.0
    %1087 = vmatprep.subr.mxu0 0.0
    %1088 = vmatpush2.msra.mxu0 0.0
    %1089 = vmatprep.subr.mxu0 0.0
    %1090 = vmatpush2.msra.mxu0 0.0
    %1091 = vmatprep.subr.mxu0 0.0
    %1092 = vmatpush2.msra.mxu0 0.0
    %1093 = vmatprep.subr.mxu0 0.0
    %1094 = vmatpush2.msra.mxu0 0.0
    %1095 = vmatprep.subr.mxu0 0.0
    %1096 = vmatpush2.msra.mxu0 0.0
    %1097 = vmatprep.subr.mxu0 0.0
    %1098 = vmatpush2.msra.mxu0 0.0
    %1099 = vmatprep.subr.mxu0 0.0
    %1100 = vmatpush2.msra.mxu0 0.0
    %1101 = vmatprep.subr.mxu0 0.0
    %1102 = vmatpush2.msra.mxu0 0.0
    %1103 = vmatprep.subr.mxu0 0.0
    %1104 = vmatpush2.msra.mxu0 0.0
    %1105 = vmatprep.subr.mxu0 0.0
    %1106 = vmatpush2.msra.mxu0 0.0
    %1107 = vmatprep.subr.mxu0 0.0
    %1108 = vmatpush2.msra.mxu0 0.0
    %1109 = vmatprep.subr.mxu0 0.0
    %1110 = vmatpush2.msra.mxu0 0.0
    %1111 = vmatprep.subr.mxu0 0.0
    %1112 = vmatpush2.msra.mxu0 0.0
    %1113 = vmatprep.mubr.f32.mxu0 0.0
    %1114 = vmatmul.mubr.f32.gmra.mxu0 %v1047
    %v1115 = vpop.f32.mrf.mxu0
    %v1116 = vadd.f32 0.0, %v1115
    %v1117 = vpop.f32.mrf.mxu0
    %1118 = vdwg.mxu0
    %v1119 = vadd.f32 %v878, %v1116
    %v1121 = vlaneseq
    %v1122 = vshrl.u32 %v1121, 7
    %v1123 = vsub.s32 0, %v1122
    %v1124 = vrot.slane %v157, %v1123
    %v1126 = vadd.f32 %v1119, %v1124
    %1127 = vst.msk [vmem:[#allocation8] sm:$0xff] %vm75, %v1126
    %1129 = vrot.lane.b32.xlu0 %v154, 96
    %v1130 = vpop.permute.xlu0 %1129
    %v1131 = vsel %vm161, %v154, 0
    %v1133 = vsel %vm161, %v1130, 0
    %1135 = vmatprep.subr.mxu0 0.0
    %1136 = vmatpush1.xpose.msra.mxu0 0.0
    %1137 = vmatprep.subr.mxu0 0.0
    %1138 = vmatpush1.xpose.msra.mxu0 0.0
    %1139 = vmatprep.subr.mxu0 0.0
    %1140 = vmatpush1.xpose.msra.mxu0 0.0
    %1141 = vmatprep.subr.mxu0 0.0
    %1142 = vmatpush1.xpose.msra.mxu0 0.0
    %1143 = vmatprep.subr.mxu0 0.0
    %1144 = vmatpush1.xpose.msra.mxu0 0.0
    %1145 = vmatprep.subr.mxu0 0.0
    %1146 = vmatpush1.xpose.msra.mxu0 0.0
    %1147 = vmatprep.subr.mxu0 0.0
    %1148 = vmatpush1.xpose.msra.mxu0 0.0
    %1149 = vmatprep.subr.mxu0 0.0
    %1150 = vmatpush1.xpose.msra.mxu0 0.0
    %1151 = vmatprep.subr.mxu0 0.0
    %1152 = vmatpush1.xpose.msra.mxu0 0.0
    %1153 = vmatprep.subr.mxu0 0.0
    %1154 = vmatpush1.xpose.msra.mxu0 0.0
    %1155 = vmatprep.subr.mxu0 0.0
    %1156 = vmatpush1.xpose.msra.mxu0 0.0
    %1157 = vmatprep.subr.mxu0 0.0
    %1158 = vmatpush1.xpose.msra.mxu0 0.0
    %1159 = vmatprep.subr.mxu0 0.0
    %1160 = vmatpush1.xpose.msra.mxu0 0.0
    %1161 = vmatprep.subr.mxu0 0.0
    %1162 = vmatpush1.xpose.msra.mxu0 0.0
    %1163 = vmatprep.subr.mxu0 0.0
    %1164 = vmatpush1.xpose.msra.mxu0 0.0
    %1165 = vmatprep.subr.mxu0 0.0
    %1166 = vmatpush1.xpose.msra.mxu0 %v1133
    %1167 = vmatprep.subr.mxu0 0.0
    %1168 = vmatpush2.xpose.msra.mxu0 0.0
    %1169 = vmatprep.subr.mxu0 0.0
    %1170 = vmatpush2.xpose.msra.mxu0 0.0
    %1171 = vmatprep.subr.mxu0 0.0
    %1172 = vmatpush2.xpose.msra.mxu0 0.0
    %1173 = vmatprep.subr.mxu0 0.0
    %1174 = vmatpush2.xpose.msra.mxu0 0.0
    %1175 = vmatprep.subr.mxu0 0.0
    %1176 = vmatpush2.xpose.msra.mxu0 0.0
    %1177 = vmatprep.subr.mxu0 0.0
    %1178 = vmatpush2.xpose.msra.mxu0 0.0
    %1179 = vmatprep.subr.mxu0 0.0
    %1180 = vmatpush2.xpose.msra.mxu0 0.0
    %1181 = vmatprep.subr.mxu0 0.0
    %1182 = vmatpush2.xpose.msra.mxu0 0.0
    %1183 = vmatprep.subr.mxu0 0.0
    %1184 = vmatpush2.xpose.msra.mxu0 0.0
    %1185 = vmatprep.subr.mxu0 0.0
    %1186 = vmatpush2.xpose.msra.mxu0 0.0
    %1187 = vmatprep.subr.mxu0 0.0
    %1188 = vmatpush2.xpose.msra.mxu0 0.0
    %1189 = vmatprep.subr.mxu0 0.0
    %1190 = vmatpush2.xpose.msra.mxu0 0.0
    %1191 = vmatprep.subr.mxu0 0.0
    %1192 = vmatpush2.xpose.msra.mxu0 0.0
    %1193 = vmatprep.subr.mxu0 0.0
    %1194 = vmatpush2.xpose.msra.mxu0 0.0
    %1195 = vmatprep.subr.mxu0 0.0
    %1196 = vmatpush2.xpose.msra.mxu0 0.0
    %1197 = vmatprep.subr.mxu0 0.0
    %1198 = vmatpush2.xpose.msra.mxu0 0.0
    %1199 = vmatprep.mubr.f32.mxu0 0.0
    %1200 = vmatmul.mubr.f32.gmra.mxu0 %v1131
    %v1201 = vpop.f32.mrf.mxu0
    %v1202 = vadd.f32 0.0, %v1201
    %v1203 = vpop.f32.mrf.mxu0
    %1204 = vdwg.mxu0
    %v1205 = vmul.f32 %v1202, 0.35355338
    %v1206 = vsel %vm161, %v1205, -inf
    %1207 = vmax.xlane.f32.xlu0 %v1206
    %v1208 = vpop.xlane.xlu0 %1207
    %v1209 = vsub.f32 %v1205, %v1208
    %v1210 = vmul.f32 %v1209, 1.442695
    %v1211 = vpow.pop %v1210
    %v1212 = vsel %vm161, %v1211, 0.0
    %1213 = vadd.xlane.f32.xlu0 %v1212
    %v1214 = vpop.xlane.xlu0 %1213
    %v1215 = vrcp.pop %v1214
    %v1216 = vmul.f32 %v1211, %v1215
    %1217 = vrot.lane.b32.xlu0 %v154, 64
    %v1218 = vpop.permute.xlu0 %1217
    %v1221 = vsel %vm161, %v1216, 0
    %1223 = vmatprep.subr.mxu0 0.0
    %1224 = vmatpush1.msra.mxu0 0.0
    %1225 = vmatprep.subr.mxu0 0.0
    %1226 = vmatpush1.msra.mxu0 0.0
    %1227 = vmatprep.subr.mxu0 0.0
    %1228 = vmatpush1.msra.mxu0 0.0
    %1229 = vmatprep.subr.mxu0 0.0
    %1230 = vmatpush1.msra.mxu0 0.0
    %1231 = vmatprep.subr.mxu0 0.0
    %1232 = vmatpush1.msra.mxu0 0.0
    %1233 = vmatprep.subr.mxu0 0.0
    %1234 = vmatpush1.msra.mxu0 0.0
    %1235 = vmatprep.subr.mxu0 0.0
    %1236 = vmatpush1.msra.mxu0 0.0
    %1237 = vmatprep.subr.mxu0 0.0
    %1238 = vmatpush1.msra.mxu0 0.0
    %1239 = vmatprep.subr.mxu0 0.0
    %1240 = vmatpush1.msra.mxu0 0.0
    %1241 = vmatprep.subr.mxu0 0.0
    %1242 = vmatpush1.msra.mxu0 0.0
    %1243 = vmatprep.subr.mxu0 0.0
    %1244 = vmatpush1.msra.mxu0 0.0
    %1245 = vmatprep.subr.mxu0 0.0
    %1246 = vmatpush1.msra.mxu0 0.0
    %1247 = vmatprep.subr.mxu0 0.0
    %1248 = vmatpush1.msra.mxu0 0.0
    %1249 = vmatprep.subr.mxu0 0.0
    %1250 = vmatpush1.msra.mxu0 0.0
    %1251 = vmatprep.subr.mxu0 0.0
    %1252 = vmatpush1.msra.mxu0 0.0
    %1253 = vmatprep.subr.mxu0 0.0
    %1254 = vmatpush1.msra.mxu0 %v1218
    %1255 = vmatprep.subr.mxu0 0.0
    %1256 = vmatpush2.msra.mxu0 0.0
    %1257 = vmatprep.subr.mxu0 0.0
    %1258 = vmatpush2.msra.mxu0 0.0
    %1259 = vmatprep.subr.mxu0 0.0
    %1260 = vmatpush2.msra.mxu0 0.0
    %1261 = vmatprep.subr.mxu0 0.0
    %1262 = vmatpush2.msra.mxu0 0.0
    %1263 = vmatprep.subr.mxu0 0.0
    %1264 = vmatpush2.msra.mxu0 0.0
    %1265 = vmatprep.subr.mxu0 0.0
    %1266 = vmatpush2.msra.mxu0 0.0
    %1267 = vmatprep.subr.mxu0 0.0
    %1268 = vmatpush2.msra.mxu0 0.0
    %1269 = vmatprep.subr.mxu0 0.0
    %1270 = vmatpush2.msra.mxu0 0.0
    %1271 = vmatprep.subr.mxu0 0.0
    %1272 = vmatpush2.msra.mxu0 0.0
    %1273 = vmatprep.subr.mxu0 0.0
    %1274 = vmatpush2.msra.mxu0 0.0
    %1275 = vmatprep.subr.mxu0 0.0
    %1276 = vmatpush2.msra.mxu0 0.0
    %1277 = vmatprep.subr.mxu0 0.0
    %1278 = vmatpush2.msra.mxu0 0.0
    %1279 = vmatprep.subr.mxu0 0.0
    %1280 = vmatpush2.msra.mxu0 0.0
    %1281 = vmatprep.subr.mxu0 0.0
    %1282 = vmatpush2.msra.mxu0 0.0
    %1283 = vmatprep.subr.mxu0 0.0
    %1284 = vmatpush2.msra.mxu0 0.0
    %1285 = vmatprep.subr.mxu0 0.0
    %1286 = vmatpush2.msra.mxu0 0.0
    %1287 = vmatprep.mubr.f32.mxu0 0.0
    %1288 = vmatmul.mubr.f32.gmra.mxu0 %v1221
    %v1289 = vpop.f32.mrf.mxu0
    %v1290 = vadd.f32 0.0, %v1289
    %v1291 = vpop.f32.mrf.mxu0
    %1292 = vdwg.mxu0
    %v1293 = vld [vmem:[#allocation7] sm:$0xff]
    %1294 = vrot.lane.b32.xlu0 %v154, 120
    %v1295 = vpop.permute.xlu0 %1294
    %1296 = vrot.lane.b32.xlu0 %v154, 88
    %v1297 = vpop.permute.xlu0 %1296
    %v1298 = vsel %vm161, %v1295, 0
    %v1300 = vsel %vm161, %v1297, 0
    %1302 = vmatprep.subr.mxu0 0.0
    %1303 = vmatpush1.xpose.msra.mxu0 0.0
    %1304 = vmatprep.subr.mxu0 0.0
    %1305 = vmatpush1.xpose.msra.mxu0 0.0
    %1306 = vmatprep.subr.mxu0 0.0
    %1307 = vmatpush1.xpose.msra.mxu0 0.0
    %1308 = vmatprep.subr.mxu0 0.0
    %1309 = vmatpush1.xpose.msra.mxu0 0.0
    %1310 = vmatprep.subr.mxu0 0.0
    %1311 = vmatpush1.xpose.msra.mxu0 0.0
    %1312 = vmatprep.subr.mxu0 0.0
    %1313 = vmatpush1.xpose.msra.mxu0 0.0
    %1314 = vmatprep.subr.mxu0 0.0
    %1315 = vmatpush1.xpose.msra.mxu0 0.0
    %1316 = vmatprep.subr.mxu0 0.0
    %1317 = vmatpush1.xpose.msra.mxu0 0.0
    %1318 = vmatprep.subr.mxu0 0.0
    %1319 = vmatpush1.xpose.msra.mxu0 0.0
    %1320 = vmatprep.subr.mxu0 0.0
    %1321 = vmatpush1.xpose.msra.mxu0 0.0
    %1322 = vmatprep.subr.mxu0 0.0
    %1323 = vmatpush1.xpose.msra.mxu0 0.0
    %1324 = vmatprep.subr.mxu0 0.0
    %1325 = vmatpush1.xpose.msra.mxu0 0.0
    %1326 = vmatprep.subr.mxu0 0.0
    %1327 = vmatpush1.xpose.msra.mxu0 0.0
    %1328 = vmatprep.subr.mxu0 0.0
    %1329 = vmatpush1.xpose.msra.mxu0 0.0
    %1330 = vmatprep.subr.mxu0 0.0
    %1331 = vmatpush1.xpose.msra.mxu0 0.0
    %1332 = vmatprep.subr.mxu0 0.0
    %1333 = vmatpush1.xpose.msra.mxu0 %v1300
    %1334 = vmatprep.subr.mxu0 0.0
    %1335 = vmatpush2.xpose.msra.mxu0 0.0
    %1336 = vmatprep.subr.mxu0 0.0
    %1337 = vmatpush2.xpose.msra.mxu0 0.0
    %1338 = vmatprep.subr.mxu0 0.0
    %1339 = vmatpush2.xpose.msra.mxu0 0.0
    %1340 = vmatprep.subr.mxu0 0.0
    %1341 = vmatpush2.xpose.msra.mxu0 0.0
    %1342 = vmatprep.subr.mxu0 0.0
    %1343 = vmatpush2.xpose.msra.mxu0 0.0
    %1344 = vmatprep.subr.mxu0 0.0
    %1345 = vmatpush2.xpose.msra.mxu0 0.0
    %1346 = vmatprep.subr.mxu0 0.0
    %1347 = vmatpush2.xpose.msra.mxu0 0.0
    %1348 = vmatprep.subr.mxu0 0.0
    %1349 = vmatpush2.xpose.msra.mxu0 0.0
    %1350 = vmatprep.subr.mxu0 0.0
    %1351 = vmatpush2.xpose.msra.mxu0 0.0
    %1352 = vmatprep.subr.mxu0 0.0
    %1353 = vmatpush2.xpose.msra.mxu0 0.0
    %1354 = vmatprep.subr.mxu0 0.0
    %1355 = vmatpush2.xpose.msra.mxu0 0.0
    %1356 = vmatprep.subr.mxu0 0.0
    %1357 = vmatpush2.xpose.msra.mxu0 0.0
    %1358 = vmatprep.subr.mxu0 0.0
    %1359 = vmatpush2.xpose.msra.mxu0 0.0
    %1360 = vmatprep.subr.mxu0 0.0
    %1361 = vmatpush2.xpose.msra.mxu0 0.0
    %1362 = vmatprep.subr.mxu0 0.0
    %1363 = vmatpush2.xpose.msra.mxu0 0.0
    %1364 = vmatprep.subr.mxu0 0.0
    %1365 = vmatpush2.xpose.msra.mxu0 0.0
    %1366 = vmatprep.mubr.f32.mxu0 0.0
    %1367 = vmatmul.mubr.f32.gmra.mxu0 %v1298
    %v1368 = vpop.f32.mrf.mxu0
    %v1369 = vadd.f32 0.0, %v1368
    %v1370 = vpop.f32.mrf.mxu0
    %1371 = vdwg.mxu0
    %v1372 = vmul.f32 %v1369, 0.35355338
    %v1373 = vsel %vm161, %v1372, -inf
    %1374 = vmax.xlane.f32.xlu0 %v1373
    %v1375 = vpop.xlane.xlu0 %1374
    %v1376 = vsub.f32 %v1372, %v1375
    %v1377 = vmul.f32 %v1376, 1.442695
    %v1378 = vpow.pop %v1377
    %v1379 = vsel %vm161, %v1378, 0.0
    %1380 = vadd.xlane.f32.xlu0 %v1379
    %v1381 = vpop.xlane.xlu0 %1380
    %v1382 = vrcp.pop %v1381
    %v1383 = vmul.f32 %v1378, %v1382
    %1384 = vrot.lane.b32.xlu0 %v154, 56
    %v1385 = vpop.permute.xlu0 %1384
    %v1388 = vsel %vm161, %v1383, 0
    %1390 = vmatprep.subr.mxu0 0.0
    %1391 = vmatpush1.msra.mxu0 0.0
    %1392 = vmatprep.subr.mxu0 0.0
    %1393 = vmatpush1.msra.mxu0 0.0
    %1394 = vmatprep.subr.mxu0 0.0
    %1395 = vmatpush1.msra.mxu0 0.0
    %1396 = vmatprep.subr.mxu0 0.0
    %1397 = vmatpush1.msra.mxu0 0.0
    %1398 = vmatprep.subr.mxu0 0.0
    %1399 = vmatpush1.msra.mxu0 0.0
    %1400 = vmatprep.subr.mxu0 0.0
    %1401 = vmatpush1.msra.mxu0 0.0
    %1402 = vmatprep.subr.mxu0 0.0
    %1403 = vmatpush1.msra.mxu0 0.0
    %1404 = vmatprep.subr.mxu0 0.0
    %1405 = vmatpush1.msra.mxu0 0.0
    %1406 = vmatprep.subr.mxu0 0.0
    %1407 = vmatpush1.msra.mxu0 0.0
    %1408 = vmatprep.subr.mxu0 0.0
    %1409 = vmatpush1.msra.mxu0 0.0
    %1410 = vmatprep.subr.mxu0 0.0
    %1411 = vmatpush1.msra.mxu0 0.0
    %1412 = vmatprep.subr.mxu0 0.0
    %1413 = vmatpush1.msra.mxu0 0.0
    %1414 = vmatprep.subr.mxu0 0.0
    %1415 = vmatpush1.msra.mxu0 0.0
    %1416 = vmatprep.subr.mxu0 0.0
    %1417 = vmatpush1.msra.mxu0 0.0
    %1418 = vmatprep.subr.mxu0 0.0
    %1419 = vmatpush1.msra.mxu0 0.0
    %1420 = vmatprep.subr.mxu0 0.0
    %1421 = vmatpush1.msra.mxu0 %v1385
    %1422 = vmatprep.subr.mxu0 0.0
    %1423 = vmatpush2.msra.mxu0 0.0
    %1424 = vmatprep.subr.mxu0 0.0
    %1425 = vmatpush2.msra.mxu0 0.0
    %1426 = vmatprep.subr.mxu0 0.0
    %1427 = vmatpush2.msra.mxu0 0.0
    %1428 = vmatprep.subr.mxu0 0.0
    %1429 = vmatpush2.msra.mxu0 0.0
    %1430 = vmatprep.subr.mxu0 0.0
    %1431 = vmatpush2.msra.mxu0 0.0
    %1432 = vmatprep.subr.mxu0 0.0
    %1433 = vmatpush2.msra.mxu0 0.0
    %1434 = vmatprep.subr.mxu0 0.0
    %1435 = vmatpush2.msra.mxu0 0.0
    %1436 = vmatprep.subr.mxu0 0.0
    %1437 = vmatpush2.msra.mxu0 0.0
    %1438 = vmatprep.subr.mxu0 0.0
    %1439 = vmatpush2.msra.mxu0 0.0
    %1440 = vmatprep.subr.mxu0 0.0
    %1441 = vmatpush2.msra.mxu0 0.0
    %1442 = vmatprep.subr.mxu0 0.0
    %1443 = vmatpush2.msra.mxu0 0.0
    %1444 = vmatprep.subr.mxu0 0.0
    %1445 = vmatpush2.msra.mxu0 0.0
    %1446 = vmatprep.subr.mxu0 0.0
    %1447 = vmatpush2.msra.mxu0 0.0
    %1448 = vmatprep.subr.mxu0 0.0
    %1449 = vmatpush2.msra.mxu0 0.0
    %1450 = vmatprep.subr.mxu0 0.0
    %1451 = vmatpush2.msra.mxu0 0.0
    %1452 = vmatprep.subr.mxu0 0.0
    %1453 = vmatpush2.msra.mxu0 0.0
    %1454 = vmatprep.mubr.f32.mxu0 0.0
    %1455 = vmatmul.mubr.f32.gmra.mxu0 %v1388
    %v1456 = vpop.f32.mrf.mxu0
    %v1457 = vadd.f32 0.0, %v1456
    %v1458 = vpop.f32.mrf.mxu0
    %1459 = vdwg.mxu0
    %v1460 = vld [vmem:[#allocation7 + $0x8] sm:$0xff]
    %v1462 = vsel %vm161, %v1457, 0
    %1464 = vmatprep.subr.mxu0 0.0
    %1465 = vmatpush1.msra.mxu0 0.0
    %1466 = vmatprep.subr.mxu0 0.0
    %1467 = vmatpush1.msra.mxu0 0.0
    %1468 = vmatprep.subr.mxu0 0.0
    %1469 = vmatpush1.msra.mxu0 0.0
    %1470 = vmatprep.subr.mxu0 0.0
    %1471 = vmatpush1.msra.mxu0 0.0
    %1472 = vmatprep.subr.mxu0 0.0
    %1473 = vmatpush1.msra.mxu0 0.0
    %1474 = vmatprep.subr.mxu0 0.0
    %1475 = vmatpush1.msra.mxu0 0.0
    %1476 = vmatprep.subr.mxu0 0.0
    %1477 = vmatpush1.msra.mxu0 0.0
    %1478 = vmatprep.subr.mxu0 0.0
    %1479 = vmatpush1.msra.mxu0 0.0
    %1480 = vmatprep.subr.mxu0 0.0
    %1481 = vmatpush1.msra.mxu0 0.0
    %1482 = vmatprep.subr.mxu0 0.0
    %1483 = vmatpush1.msra.mxu0 0.0
    %1484 = vmatprep.subr.mxu0 0.0
    %1485 = vmatpush1.msra.mxu0 0.0
    %1486 = vmatprep.subr.mxu0 0.0
    %1487 = vmatpush1.msra.mxu0 0.0
    %1488 = vmatprep.subr.mxu0 0.0
    %1489 = vmatpush1.msra.mxu0 0.0
    %1490 = vmatprep.subr.mxu0 0.0
    %1491 = vmatpush1.msra.mxu0 0.0
    %1492 = vmatprep.subr.mxu0 0.0
    %1493 = vmatpush1.msra.mxu0 0.0
    %1494 = vmatprep.subr.mxu0 0.0
    %1495 = vmatpush1.msra.mxu0 %v1460
    %1496 = vmatprep.subr.mxu0 0.0
    %1497 = vmatpush2.msra.mxu0 0.0
    %1498 = vmatprep.subr.mxu0 0.0
    %1499 = vmatpush2.msra.mxu0 0.0
    %1500 = vmatprep.subr.mxu0 0.0
    %1501 = vmatpush2.msra.mxu0 0.0
    %1502 = vmatprep.subr.mxu0 0.0
    %1503 = vmatpush2.msra.mxu0 0.0
    %1504 = vmatprep.subr.mxu0 0.0
    %1505 = vmatpush2.msra.mxu0 0.0
    %1506 = vmatprep.subr.mxu0 0.0
    %1507 = vmatpush2.msra.mxu0 0.0
    %1508 = vmatprep.subr.mxu0 0.0
    %1509 = vmatpush2.msra.mxu0 0.0
    %1510 = vmatprep.subr.mxu0 0.0
    %1511 = vmatpush2.msra.mxu0 0.0
    %1512 = vmatprep.subr.mxu0 0.0
    %1513 = vmatpush2.msra.mxu0 0.0
    %1514 = vmatprep.subr.mxu0 0.0
    %1515 = vmatpush2.msra.mxu0 0.0
    %1516 = vmatprep.subr.mxu0 0.0
    %1517 = vmatpush2.msra.mxu0 0.0
    %1518 = vmatprep.subr.mxu0 0.0
    %1519 = vmatpush2.msra.mxu0 0.0
    %1520 = vmatprep.subr.mxu0 0.0
    %1521 = vmatpush2.msra.mxu0 0.0
    %1522 = vmatprep.subr.mxu0 0.0
    %1523 = vmatpush2.msra.mxu0 0.0
    %1524 = vmatprep.subr.mxu0 0.0
    %1525 = vmatpush2.msra.mxu0 0.0
    %1526 = vmatprep.subr.mxu0 0.0
    %1527 = vmatpush2.msra.mxu0 0.0
    %1528 = vmatprep.mubr.f32.mxu0 0.0
    %1529 = vmatmul.mubr.f32.gmra.mxu0 %v1462
    %v1530 = vpop.f32.mrf.mxu0
    %v1531 = vadd.f32 0.0, %v1530
    %v1532 = vpop.f32.mrf.mxu0
    %1533 = vdwg.mxu0
    %v1535 = vsel %vm161, %v1290, 0
    %1537 = vmatprep.subr.mxu0 0.0
    %1538 = vmatpush1.msra.mxu0 0.0
    %1539 = vmatprep.subr.mxu0 0.0
    %1540 = vmatpush1.msra.mxu0 0.0
    %1541 = vmatprep.subr.mxu0 0.0
    %1542 = vmatpush1.msra.mxu0 0.0
    %1543 = vmatprep.subr.mxu0 0.0
    %1544 = vmatpush1.msra.mxu0 0.0
    %1545 = vmatprep.subr.mxu0 0.0
    %1546 = vmatpush1.msra.mxu0 0.0
    %1547 = vmatprep.subr.mxu0 0.0
    %1548 = vmatpush1.msra.mxu0 0.0
    %1549 = vmatprep.subr.mxu0 0.0
    %1550 = vmatpush1.msra.mxu0 0.0
    %1551 = vmatprep.subr.mxu0 0.0
    %1552 = vmatpush1.msra.mxu0 0.0
    %1553 = vmatprep.subr.mxu0 0.0
    %1554 = vmatpush1.msra.mxu0 0.0
    %1555 = vmatprep.subr.mxu0 0.0
    %1556 = vmatpush1.msra.mxu0 0.0
    %1557 = vmatprep.subr.mxu0 0.0
    %1558 = vmatpush1.msra.mxu0 0.0
    %1559 = vmatprep.subr.mxu0 0.0
    %1560 = vmatpush1.msra.mxu0 0.0
    %1561 = vmatprep.subr.mxu0 0.0
    %1562 = vmatpush1.msra.mxu0 0.0
    %1563 = vmatprep.subr.mxu0 0.0
    %1564 = vmatpush1.msra.mxu0 0.0
    %1565 = vmatprep.subr.mxu0 0.0
    %1566 = vmatpush1.msra.mxu0 0.0
    %1567 = vmatprep.subr.mxu0 0.0
    %1568 = vmatpush1.msra.mxu0 %v1293
    %1569 = vmatprep.subr.mxu0 0.0
    %1570 = vmatpush2.msra.mxu0 0.0
    %1571 = vmatprep.subr.mxu0 0.0
    %1572 = vmatpush2.msra.mxu0 0.0
    %1573 = vmatprep.subr.mxu0 0.0
    %1574 = vmatpush2.msra.mxu0 0.0
    %1575 = vmatprep.subr.mxu0 0.0
    %1576 = vmatpush2.msra.mxu0 0.0
    %1577 = vmatprep.subr.mxu0 0.0
    %1578 = vmatpush2.msra.mxu0 0.0
    %1579 = vmatprep.subr.mxu0 0.0
    %1580 = vmatpush2.msra.mxu0 0.0
    %1581 = vmatprep.subr.mxu0 0.0
    %1582 = vmatpush2.msra.mxu0 0.0
    %1583 = vmatprep.subr.mxu0 0.0
    %1584 = vmatpush2.msra.mxu0 0.0
    %1585 = vmatprep.subr.mxu0 0.0
    %1586 = vmatpush2.msra.mxu0 0.0
    %1587 = vmatprep.subr.mxu0 0.0
    %1588 = vmatpush2.msra.mxu0 0.0
    %1589 = vmatprep.subr.mxu0 0.0
    %1590 = vmatpush2.msra.mxu0 0.0
    %1591 = vmatprep.subr.mxu0 0.0
    %1592 = vmatpush2.msra.mxu0 0.0
    %1593 = vmatprep.subr.mxu0 0.0
    %1594 = vmatpush2.msra.mxu0 0.0
    %1595 = vmatprep.subr.mxu0 0.0
    %1596 = vmatpush2.msra.mxu0 0.0
    %1597 = vmatprep.subr.mxu0 0.0
    %1598 = vmatpush2.msra.mxu0 0.0
    %1599 = vmatprep.subr.mxu0 0.0
    %1600 = vmatpush2.msra.mxu0 0.0
    %1601 = vmatprep.mubr.f32.mxu0 0.0
    %1602 = vmatmul.mubr.f32.gmra.mxu0 %v1535
    %v1603 = vpop.f32.mrf.mxu0
    %v1604 = vadd.f32 %v1531, %v1603
    %v1605 = vpop.f32.mrf.mxu0
    %1606 = vdwg.mxu0
    %1607 = vrot.lane.b32.xlu0 %v154, 112
    %v1608 = vpop.permute.xlu0 %1607
    %1609 = vrot.lane.b32.xlu0 %v154, 80
    %v1610 = vpop.permute.xlu0 %1609
    %v1611 = vsel %vm161, %v1608, 0
    %v1613 = vsel %vm161, %v1610, 0
    %1615 = vmatprep.subr.mxu0 0.0
    %1616 = vmatpush1.xpose.msra.mxu0 0.0
    %1617 = vmatprep.subr.mxu0 0.0
    %1618 = vmatpush1.xpose.msra.mxu0 0.0
    %1619 = vmatprep.subr.mxu0 0.0
    %1620 = vmatpush1.xpose.msra.mxu0 0.0
    %1621 = vmatprep.subr.mxu0 0.0
    %1622 = vmatpush1.xpose.msra.mxu0 0.0
    %1623 = vmatprep.subr.mxu0 0.0
    %1624 = vmatpush1.xpose.msra.mxu0 0.0
    %1625 = vmatprep.subr.mxu0 0.0
    %1626 = vmatpush1.xpose.msra.mxu0 0.0
    %1627 = vmatprep.subr.mxu0 0.0
    %1628 = vmatpush1.xpose.msra.mxu0 0.0
    %1629 = vmatprep.subr.mxu0 0.0
    %1630 = vmatpush1.xpose.msra.mxu0 0.0
    %1631 = vmatprep.subr.mxu0 0.0
    %1632 = vmatpush1.xpose.msra.mxu0 0.0
    %1633 = vmatprep.subr.mxu0 0.0
    %1634 = vmatpush1.xpose.msra.mxu0 0.0
    %1635 = vmatprep.subr.mxu0 0.0
    %1636 = vmatpush1.xpose.msra.mxu0 0.0
    %1637 = vmatprep.subr.mxu0 0.0
    %1638 = vmatpush1.xpose.msra.mxu0 0.0
    %1639 = vmatprep.subr.mxu0 0.0
    %1640 = vmatpush1.xpose.msra.mxu0 0.0
    %1641 = vmatprep.subr.mxu0 0.0
    %1642 = vmatpush1.xpose.msra.mxu0 0.0
    %1643 = vmatprep.subr.mxu0 0.0
    %1644 = vmatpush1.xpose.msra.mxu0 0.0
    %1645 = vmatprep.subr.mxu0 0.0
    %1646 = vmatpush1.xpose.msra.mxu0 %v1613
    %1647 = vmatprep.subr.mxu0 0.0
    %1648 = vmatpush2.xpose.msra.mxu0 0.0
    %1649 = vmatprep.subr.mxu0 0.0
    %1650 = vmatpush2.xpose.msra.mxu0 0.0
    %1651 = vmatprep.subr.mxu0 0.0
    %1652 = vmatpush2.xpose.msra.mxu0 0.0
    %1653 = vmatprep.subr.mxu0 0.0
    %1654 = vmatpush2.xpose.msra.mxu0 0.0
    %1655 = vmatprep.subr.mxu0 0.0
    %1656 = vmatpush2.xpose.msra.mxu0 0.0
    %1657 = vmatprep.subr.mxu0 0.0
    %1658 = vmatpush2.xpose.msra.mxu0 0.0
    %1659 = vmatprep.subr.mxu0 0.0
    %1660 = vmatpush2.xpose.msra.mxu0 0.0
    %1661 = vmatprep.subr.mxu0 0.0
    %1662 = vmatpush2.xpose.msra.mxu0 0.0
    %1663 = vmatprep.subr.mxu0 0.0
    %1664 = vmatpush2.xpose.msra.mxu0 0.0
    %1665 = vmatprep.subr.mxu0 0.0
    %1666 = vmatpush2.xpose.msra.mxu0 0.0
    %1667 = vmatprep.subr.mxu0 0.0
    %1668 = vmatpush2.xpose.msra.mxu0 0.0
    %1669 = vmatprep.subr.mxu0 0.0
    %1670 = vmatpush2.xpose.msra.mxu0 0.0
    %1671 = vmatprep.subr.mxu0 0.0
    %1672 = vmatpush2.xpose.msra.mxu0 0.0
    %1673 = vmatprep.subr.mxu0 0.0
    %1674 = vmatpush2.xpose.msra.mxu0 0.0
    %1675 = vmatprep.subr.mxu0 0.0
    %1676 = vmatpush2.xpose.msra.mxu0 0.0
    %1677 = vmatprep.subr.mxu0 0.0
    %1678 = vmatpush2.xpose.msra.mxu0 0.0
    %1679 = vmatprep.mubr.f32.mxu0 0.0
    %1680 = vmatmul.mubr.f32.gmra.mxu0 %v1611
    %v1681 = vpop.f32.mrf.mxu0
    %v1682 = vadd.f32 0.0, %v1681
    %v1683 = vpop.f32.mrf.mxu0
    %1684 = vdwg.mxu0
    %v1685 = vmul.f32 %v1682, 0.35355338
    %v1686 = vsel %vm161, %v1685, -inf
    %1687 = vmax.xlane.f32.xlu0 %v1686
    %v1688 = vpop.xlane.xlu0 %1687
    %v1689 = vsub.f32 %v1685, %v1688
    %v1690 = vmul.f32 %v1689, 1.442695
    %v1691 = vpow.pop %v1690
    %v1692 = vsel %vm161, %v1691, 0.0
    %1693 = vadd.xlane.f32.xlu0 %v1692
    %v1694 = vpop.xlane.xlu0 %1693
    %v1695 = vrcp.pop %v1694
    %v1696 = vmul.f32 %v1691, %v1695
    %1697 = vrot.lane.b32.xlu0 %v154, 48
    %v1698 = vpop.permute.xlu0 %1697
    %v1701 = vsel %vm161, %v1696, 0
    %1703 = vmatprep.subr.mxu0 0.0
    %1704 = vmatpush1.msra.mxu0 0.0
    %1705 = vmatprep.subr.mxu0 0.0
    %1706 = vmatpush1.msra.mxu0 0.0
    %1707 = vmatprep.subr.mxu0 0.0
    %1708 = vmatpush1.msra.mxu0 0.0
    %1709 = vmatprep.subr.mxu0 0.0
    %1710 = vmatpush1.msra.mxu0 0.0
    %1711 = vmatprep.subr.mxu0 0.0
    %1712 = vmatpush1.msra.mxu0 0.0
    %1713 = vmatprep.subr.mxu0 0.0
    %1714 = vmatpush1.msra.mxu0 0.0
    %1715 = vmatprep.subr.mxu0 0.0
    %1716 = vmatpush1.msra.mxu0 0.0
    %1717 = vmatprep.subr.mxu0 0.0
    %1718 = vmatpush1.msra.mxu0 0.0
    %1719 = vmatprep.subr.mxu0 0.0
    %1720 = vmatpush1.msra.mxu0 0.0
    %1721 = vmatprep.subr.mxu0 0.0
    %1722 = vmatpush1.msra.mxu0 0.0
    %1723 = vmatprep.subr.mxu0 0.0
    %1724 = vmatpush1.msra.mxu0 0.0
    %1725 = vmatprep.subr.mxu0 0.0
    %1726 = vmatpush1.msra.mxu0 0.0
    %1727 = vmatprep.subr.mxu0 0.0
    %1728 = vmatpush1.msra.mxu0 0.0
    %1729 = vmatprep.subr.mxu0 0.0
    %1730 = vmatpush1.msra.mxu0 0.0
    %1731 = vmatprep.subr.mxu0 0.0
    %1732 = vmatpush1.msra.mxu0 0.0
    %1733 = vmatprep.subr.mxu0 0.0
    %1734 = vmatpush1.msra.mxu0 %v1698
    %1735 = vmatprep.subr.mxu0 0.0
    %1736 = vmatpush2.msra.mxu0 0.0
    %1737 = vmatprep.subr.mxu0 0.0
    %1738 = vmatpush2.msra.mxu0 0.0
    %1739 = vmatprep.subr.mxu0 0.0
    %1740 = vmatpush2.msra.mxu0 0.0
    %1741 = vmatprep.subr.mxu0 0.0
    %1742 = vmatpush2.msra.mxu0 0.0
    %1743 = vmatprep.subr.mxu0 0.0
    %1744 = vmatpush2.msra.mxu0 0.0
    %1745 = vmatprep.subr.mxu0 0.0
    %1746 = vmatpush2.msra.mxu0 0.0
    %1747 = vmatprep.subr.mxu0 0.0
    %1748 = vmatpush2.msra.mxu0 0.0
    %1749 = vmatprep.subr.mxu0 0.0
    %1750 = vmatpush2.msra.mxu0 0.0
    %1751 = vmatprep.subr.mxu0 0.0
    %1752 = vmatpush2.msra.mxu0 0.0
    %1753 = vmatprep.subr.mxu0 0.0
    %1754 = vmatpush2.msra.mxu0 0.0
    %1755 = vmatprep.subr.mxu0 0.0
    %1756 = vmatpush2.msra.mxu0 0.0
    %1757 = vmatprep.subr.mxu0 0.0
    %1758 = vmatpush2.msra.mxu0 0.0
    %1759 = vmatprep.subr.mxu0 0.0
    %1760 = vmatpush2.msra.mxu0 0.0
    %1761 = vmatprep.subr.mxu0 0.0
    %1762 = vmatpush2.msra.mxu0 0.0
    %1763 = vmatprep.subr.mxu0 0.0
    %1764 = vmatpush2.msra.mxu0 0.0
    %1765 = vmatprep.subr.mxu0 0.0
    %1766 = vmatpush2.msra.mxu0 0.0
    %1767 = vmatprep.mubr.f32.mxu0 0.0
    %1768 = vmatmul.mubr.f32.gmra.mxu0 %v1701
    %v1769 = vpop.f32.mrf.mxu0
    %v1770 = vadd.f32 0.0, %v1769
    %v1771 = vpop.f32.mrf.mxu0
    %1772 = vdwg.mxu0
    %v1773 = vld [vmem:[#allocation7 + $0x10] sm:$0xff]
    %v1775 = vsel %vm161, %v1770, 0
    %1777 = vmatprep.subr.mxu0 0.0
    %1778 = vmatpush1.msra.mxu0 0.0
    %1779 = vmatprep.subr.mxu0 0.0
    %1780 = vmatpush1.msra.mxu0 0.0
    %1781 = vmatprep.subr.mxu0 0.0
    %1782 = vmatpush1.msra.mxu0 0.0
    %1783 = vmatprep.subr.mxu0 0.0
    %1784 = vmatpush1.msra.mxu0 0.0
    %1785 = vmatprep.subr.mxu0 0.0
    %1786 = vmatpush1.msra.mxu0 0.0
    %1787 = vmatprep.subr.mxu0 0.0
    %1788 = vmatpush1.msra.mxu0 0.0
    %1789 = vmatprep.subr.mxu0 0.0
    %1790 = vmatpush1.msra.mxu0 0.0
    %1791 = vmatprep.subr.mxu0 0.0
    %1792 = vmatpush1.msra.mxu0 0.0
    %1793 = vmatprep.subr.mxu0 0.0
    %1794 = vmatpush1.msra.mxu0 0.0
    %1795 = vmatprep.subr.mxu0 0.0
    %1796 = vmatpush1.msra.mxu0 0.0
    %1797 = vmatprep.subr.mxu0 0.0
    %1798 = vmatpush1.msra.mxu0 0.0
    %1799 = vmatprep.subr.mxu0 0.0
    %1800 = vmatpush1.msra.mxu0 0.0
    %1801 = vmatprep.subr.mxu0 0.0
    %1802 = vmatpush1.msra.mxu0 0.0
    %1803 = vmatprep.subr.mxu0 0.0
    %1804 = vmatpush1.msra.mxu0 0.0
    %1805 = vmatprep.subr.mxu0 0.0
    %1806 = vmatpush1.msra.mxu0 0.0
    %1807 = vmatprep.subr.mxu0 0.0
    %1808 = vmatpush1.msra.mxu0 %v1773
    %1809 = vmatprep.subr.mxu0 0.0
    %1810 = vmatpush2.msra.mxu0 0.0
    %1811 = vmatprep.subr.mxu0 0.0
    %1812 = vmatpush2.msra.mxu0 0.0
    %1813 = vmatprep.subr.mxu0 0.0
    %1814 = vmatpush2.msra.mxu0 0.0
    %1815 = vmatprep.subr.mxu0 0.0
    %1816 = vmatpush2.msra.mxu0 0.0
    %1817 = vmatprep.subr.mxu0 0.0
    %1818 = vmatpush2.msra.mxu0 0.0
    %1819 = vmatprep.subr.mxu0 0.0
    %1820 = vmatpush2.msra.mxu0 0.0
    %1821 = vmatprep.subr.mxu0 0.0
    %1822 = vmatpush2.msra.mxu0 0.0
    %1823 = vmatprep.subr.mxu0 0.0
    %1824 = vmatpush2.msra.mxu0 0.0
    %1825 = vmatprep.subr.mxu0 0.0
    %1826 = vmatpush2.msra.mxu0 0.0
    %1827 = vmatprep.subr.mxu0 0.0
    %1828 = vmatpush2.msra.mxu0 0.0
    %1829 = vmatprep.subr.mxu0 0.0
    %1830 = vmatpush2.msra.mxu0 0.0
    %1831 = vmatprep.subr.mxu0 0.0
    %1832 = vmatpush2.msra.mxu0 0.0
    %1833 = vmatprep.subr.mxu0 0.0
    %1834 = vmatpush2.msra.mxu0 0.0
    %1835 = vmatprep.subr.mxu0 0.0
    %1836 = vmatpush2.msra.mxu0 0.0
    %1837 = vmatprep.subr.mxu0 0.0
    %1838 = vmatpush2.msra.mxu0 0.0
    %1839 = vmatprep.subr.mxu0 0.0
    %1840 = vmatpush2.msra.mxu0 0.0
    %1841 = vmatprep.mubr.f32.mxu0 0.0
    %1842 = vmatmul.mubr.f32.gmra.mxu0 %v1775
    %v1843 = vpop.f32.mrf.mxu0
    %v1844 = vadd.f32 0.0, %v1843
    %v1845 = vpop.f32.mrf.mxu0
    %1846 = vdwg.mxu0
    %v1847 = vadd.f32 %v1604, %v1844
    %1848 = vrot.lane.b32.xlu0 %v154, 104
    %v1849 = vpop.permute.xlu0 %1848
    %1850 = vrot.lane.b32.xlu0 %v154, 72
    %v1851 = vpop.permute.xlu0 %1850
    %v1852 = vsel %vm161, %v1849, 0
    %v1854 = vsel %vm161, %v1851, 0
    %1856 = vmatprep.subr.mxu0 0.0
    %1857 = vmatpush1.xpose.msra.mxu0 0.0
    %1858 = vmatprep.subr.mxu0 0.0
    %1859 = vmatpush1.xpose.msra.mxu0 0.0
    %1860 = vmatprep.subr.mxu0 0.0
    %1861 = vmatpush1.xpose.msra.mxu0 0.0
    %1862 = vmatprep.subr.mxu0 0.0
    %1863 = vmatpush1.xpose.msra.mxu0 0.0
    %1864 = vmatprep.subr.mxu0 0.0
    %1865 = vmatpush1.xpose.msra.mxu0 0.0
    %1866 = vmatprep.subr.mxu0 0.0
    %1867 = vmatpush1.xpose.msra.mxu0 0.0
    %1868 = vmatprep.subr.mxu0 0.0
    %1869 = vmatpush1.xpose.msra.mxu0 0.0
    %1870 = vmatprep.subr.mxu0 0.0
    %1871 = vmatpush1.xpose.msra.mxu0 0.0
    %1872 = vmatprep.subr.mxu0 0.0
    %1873 = vmatpush1.xpose.msra.mxu0 0.0
    %1874 = vmatprep.subr.mxu0 0.0
    %1875 = vmatpush1.xpose.msra.mxu0 0.0
    %1876 = vmatprep.subr.mxu0 0.0
    %1877 = vmatpush1.xpose.msra.mxu0 0.0
    %1878 = vmatprep.subr.mxu0 0.0
    %1879 = vmatpush1.xpose.msra.mxu0 0.0
    %1880 = vmatprep.subr.mxu0 0.0
    %1881 = vmatpush1.xpose.msra.mxu0 0.0
    %1882 = vmatprep.subr.mxu0 0.0
    %1883 = vmatpush1.xpose.msra.mxu0 0.0
    %1884 = vmatprep.subr.mxu0 0.0
    %1885 = vmatpush1.xpose.msra.mxu0 0.0
    %1886 = vmatprep.subr.mxu0 0.0
    %1887 = vmatpush1.xpose.msra.mxu0 %v1854
    %1888 = vmatprep.subr.mxu0 0.0
    %1889 = vmatpush2.xpose.msra.mxu0 0.0
    %1890 = vmatprep.subr.mxu0 0.0
    %1891 = vmatpush2.xpose.msra.mxu0 0.0
    %1892 = vmatprep.subr.mxu0 0.0
    %1893 = vmatpush2.xpose.msra.mxu0 0.0
    %1894 = vmatprep.subr.mxu0 0.0
    %1895 = vmatpush2.xpose.msra.mxu0 0.0
    %1896 = vmatprep.subr.mxu0 0.0
    %1897 = vmatpush2.xpose.msra.mxu0 0.0
    %1898 = vmatprep.subr.mxu0 0.0
    %1899 = vmatpush2.xpose.msra.mxu0 0.0
    %1900 = vmatprep.subr.mxu0 0.0
    %1901 = vmatpush2.xpose.msra.mxu0 0.0
    %1902 = vmatprep.subr.mxu0 0.0
    %1903 = vmatpush2.xpose.msra.mxu0 0.0
    %1904 = vmatprep.subr.mxu0 0.0
    %1905 = vmatpush2.xpose.msra.mxu0 0.0
    %1906 = vmatprep.subr.mxu0 0.0
    %1907 = vmatpush2.xpose.msra.mxu0 0.0
    %1908 = vmatprep.subr.mxu0 0.0
    %1909 = vmatpush2.xpose.msra.mxu0 0.0
    %1910 = vmatprep.subr.mxu0 0.0
    %1911 = vmatpush2.xpose.msra.mxu0 0.0
    %1912 = vmatprep.subr.mxu0 0.0
    %1913 = vmatpush2.xpose.msra.mxu0 0.0
    %1914 = vmatprep.subr.mxu0 0.0
    %1915 = vmatpush2.xpose.msra.mxu0 0.0
    %1916 = vmatprep.subr.mxu0 0.0
    %1917 = vmatpush2.xpose.msra.mxu0 0.0
    %1918 = vmatprep.subr.mxu0 0.0
    %1919 = vmatpush2.xpose.msra.mxu0 0.0
    %1920 = vmatprep.mubr.f32.mxu0 0.0
    %1921 = vmatmul.mubr.f32.gmra.mxu0 %v1852
    %v1922 = vpop.f32.mrf.mxu0
    %v1923 = vadd.f32 0.0, %v1922
    %v1924 = vpop.f32.mrf.mxu0
    %1925 = vdwg.mxu0
    %v1926 = vmul.f32 %v1923, 0.35355338
    %v1927 = vsel %vm161, %v1926, -inf
    %1928 = vmax.xlane.f32.xlu0 %v1927
    %v1929 = vpop.xlane.xlu0 %1928
    %v1930 = vsub.f32 %v1926, %v1929
    %v1931 = vmul.f32 %v1930, 1.442695
    %v1932 = vpow.pop %v1931
    %v1933 = vsel %vm161, %v1932, 0.0
    %1934 = vadd.xlane.f32.xlu0 %v1933
    %v1935 = vpop.xlane.xlu0 %1934
    %v1936 = vrcp.pop %v1935
    %v1937 = vmul.f32 %v1932, %v1936
    %1938 = vrot.lane.b32.xlu0 %v154, 40
    %v1939 = vpop.permute.xlu0 %1938
    %v1942 = vsel %vm161, %v1937, 0
    %1944 = vmatprep.subr.mxu0 0.0
    %1945 = vmatpush1.msra.mxu0 0.0
    %1946 = vmatprep.subr.mxu0 0.0
    %1947 = vmatpush1.msra.mxu0 0.0
    %1948 = vmatprep.subr.mxu0 0.0
    %1949 = vmatpush1.msra.mxu0 0.0
    %1950 = vmatprep.subr.mxu0 0.0
    %1951 = vmatpush1.msra.mxu0 0.0
    %1952 = vmatprep.subr.mxu0 0.0
    %1953 = vmatpush1.msra.mxu0 0.0
    %1954 = vmatprep.subr.mxu0 0.0
    %1955 = vmatpush1.msra.mxu0 0.0
    %1956 = vmatprep.subr.mxu0 0.0
    %1957 = vmatpush1.msra.mxu0 0.0
    %1958 = vmatprep.subr.mxu0 0.0
    %1959 = vmatpush1.msra.mxu0 0.0
    %1960 = vmatprep.subr.mxu0 0.0
    %1961 = vmatpush1.msra.mxu0 0.0
    %1962 = vmatprep.subr.mxu0 0.0
    %1963 = vmatpush1.msra.mxu0 0.0
    %1964 = vmatprep.subr.mxu0 0.0
    %1965 = vmatpush1.msra.mxu0 0.0
    %1966 = vmatprep.subr.mxu0 0.0
    %1967 = vmatpush1.msra.mxu0 0.0
    %1968 = vmatprep.subr.mxu0 0.0
    %1969 = vmatpush1.msra.mxu0 0.0
    %1970 = vmatprep.subr.mxu0 0.0
    %1971 = vmatpush1.msra.mxu0 0.0
    %1972 = vmatprep.subr.mxu0 0.0
    %1973 = vmatpush1.msra.mxu0 0.0
    %1974 = vmatprep.subr.mxu0 0.0
    %1975 = vmatpush1.msra.mxu0 %v1939
    %1976 = vmatprep.subr.mxu0 0.0
    %1977 = vmatpush2.msra.mxu0 0.0
    %1978 = vmatprep.subr.mxu0 0.0
    %1979 = vmatpush2.msra.mxu0 0.0
    %1980 = vmatprep.subr.mxu0 0.0
    %1981 = vmatpush2.msra.mxu0 0.0
    %1982 = vmatprep.subr.mxu0 0.0
    %1983 = vmatpush2.msra.mxu0 0.0
    %1984 = vmatprep.subr.mxu0 0.0
    %1985 = vmatpush2.msra.mxu0 0.0
    %1986 = vmatprep.subr.mxu0 0.0
    %1987 = vmatpush2.msra.mxu0 0.0
    %1988 = vmatprep.subr.mxu0 0.0
    %1989 = vmatpush2.msra.mxu0 0.0
    %1990 = vmatprep.subr.mxu0 0.0
    %1991 = vmatpush2.msra.mxu0 0.0
    %1992 = vmatprep.subr.mxu0 0.0
    %1993 = vmatpush2.msra.mxu0 0.0
    %1994 = vmatprep.subr.mxu0 0.0
    %1995 = vmatpush2.msra.mxu0 0.0
    %1996 = vmatprep.subr.mxu0 0.0
    %1997 = vmatpush2.msra.mxu0 0.0
    %1998 = vmatprep.subr.mxu0 0.0
    %1999 = vmatpush2.msra.mxu0 0.0
    %2000 = vmatprep.subr.mxu0 0.0
    %2001 = vmatpush2.msra.mxu0 0.0
    %2002 = vmatprep.subr.mxu0 0.0
    %2003 = vmatpush2.msra.mxu0 0.0
    %2004 = vmatprep.subr.mxu0 0.0
    %2005 = vmatpush2.msra.mxu0 0.0
    %2006 = vmatprep.subr.mxu0 0.0
    %2007 = vmatpush2.msra.mxu0 0.0
    %2008 = vmatprep.mubr.f32.mxu0 0.0
    %2009 = vmatmul.mubr.f32.gmra.mxu0 %v1942
    %v2010 = vpop.f32.mrf.mxu0
    %v2011 = vadd.f32 0.0, %v2010
    %v2012 = vpop.f32.mrf.mxu0
    %2013 = vdwg.mxu0
    %v2014 = vld [vmem:[#allocation7 + $0x18] sm:$0xff]
    %v2016 = vsel %vm161, %v2011, 0
    %2018 = vmatprep.subr.mxu0 0.0
    %2019 = vmatpush1.msra.mxu0 0.0
    %2020 = vmatprep.subr.mxu0 0.0
    %2021 = vmatpush1.msra.mxu0 0.0
    %2022 = vmatprep.subr.mxu0 0.0
    %2023 = vmatpush1.msra.mxu0 0.0
    %2024 = vmatprep.subr.mxu0 0.0
    %2025 = vmatpush1.msra.mxu0 0.0
    %2026 = vmatprep.subr.mxu0 0.0
    %2027 = vmatpush1.msra.mxu0 0.0
    %2028 = vmatprep.subr.mxu0 0.0
    %2029 = vmatpush1.msra.mxu0 0.0
    %2030 = vmatprep.subr.mxu0 0.0
    %2031 = vmatpush1.msra.mxu0 0.0
    %2032 = vmatprep.subr.mxu0 0.0
    %2033 = vmatpush1.msra.mxu0 0.0
    %2034 = vmatprep.subr.mxu0 0.0
    %2035 = vmatpush1.msra.mxu0 0.0
    %2036 = vmatprep.subr.mxu0 0.0
    %2037 = vmatpush1.msra.mxu0 0.0
    %2038 = vmatprep.subr.mxu0 0.0
    %2039 = vmatpush1.msra.mxu0 0.0
    %2040 = vmatprep.subr.mxu0 0.0
    %2041 = vmatpush1.msra.mxu0 0.0
    %2042 = vmatprep.subr.mxu0 0.0
    %2043 = vmatpush1.msra.mxu0 0.0
    %2044 = vmatprep.subr.mxu0 0.0
    %2045 = vmatpush1.msra.mxu0 0.0
    %2046 = vmatprep.subr.mxu0 0.0
    %2047 = vmatpush1.msra.mxu0 0.0
    %2048 = vmatprep.subr.mxu0 0.0
    %2049 = vmatpush1.msra.mxu0 %v2014
    %2050 = vmatprep.subr.mxu0 0.0
    %2051 = vmatpush2.msra.mxu0 0.0
    %2052 = vmatprep.subr.mxu0 0.0
    %2053 = vmatpush2.msra.mxu0 0.0
    %2054 = vmatprep.subr.mxu0 0.0
    %2055 = vmatpush2.msra.mxu0 0.0
    %2056 = vmatprep.subr.mxu0 0.0
    %2057 = vmatpush2.msra.mxu0 0.0
    %2058 = vmatprep.subr.mxu0 0.0
    %2059 = vmatpush2.msra.mxu0 0.0
    %2060 = vmatprep.subr.mxu0 0.0
    %2061 = vmatpush2.msra.mxu0 0.0
    %2062 = vmatprep.subr.mxu0 0.0
    %2063 = vmatpush2.msra.mxu0 0.0
    %2064 = vmatprep.subr.mxu0 0.0
    %2065 = vmatpush2.msra.mxu0 0.0
    %2066 = vmatprep.subr.mxu0 0.0
    %2067 = vmatpush2.msra.mxu0 0.0
    %2068 = vmatprep.subr.mxu0 0.0
    %2069 = vmatpush2.msra.mxu0 0.0
    %2070 = vmatprep.subr.mxu0 0.0
    %2071 = vmatpush2.msra.mxu0 0.0
    %2072 = vmatprep.subr.mxu0 0.0
    %2073 = vmatpush2.msra.mxu0 0.0
    %2074 = vmatprep.subr.mxu0 0.0
    %2075 = vmatpush2.msra.mxu0 0.0
    %2076 = vmatprep.subr.mxu0 0.0
    %2077 = vmatpush2.msra.mxu0 0.0
    %2078 = vmatprep.subr.mxu0 0.0
    %2079 = vmatpush2.msra.mxu0 0.0
    %2080 = vmatprep.subr.mxu0 0.0
    %2081 = vmatpush2.msra.mxu0 0.0
    %2082 = vmatprep.mubr.f32.mxu0 0.0
    %2083 = vmatmul.mubr.f32.gmra.mxu0 %v2016
    %v2084 = vpop.f32.mrf.mxu0
    %v2085 = vadd.f32 0.0, %v2084
    %v2086 = vpop.f32.mrf.mxu0
    %2087 = vdwg.mxu0
    %v2088 = vadd.f32 %v1847, %v2085
    %v2089 = vadd.f32 %v2088, %v1124
    %2090 = vst.msk [vmem:[#allocation8 + $0x8] sm:$0xff] %vm75, %v2089
    // Predicated region
    $region34: #{tpu_custom_call.1} parent=1 // pred_check
      _
    $region35: #{tpu_custom_call.1} parent=1 // pred_check_branch
      %2092 = sbr.rel (0) target = $region37
    $region36: #{tpu_custom_call.1} parent=1 // pred_region
      %s2094 = ssub.s32 256, 256
      %2095 = vsyncadd [#allocation4], %s2094
      %s2096 = sshll.u32 [#allocation8], 4
      %s2097 = int_to_ptr.vmem [resolvable:$true] %s2096
      %2102 = dma.vmem_to_hbm [thread:$0]  %s2097, 256, %s5, [#allocation4], 128, 128, 8
    $region37: #{tpu_custom_call.1} parent=1 // pred_fallthru
      _
    // Predicated region
    $region38: #{tpu_custom_call.1} parent=1 // pred_check
      _
    $region39: #{tpu_custom_call.1} parent=1 // pred_check_branch
      %2104 = sbr.rel (0) target = $region41
    $region40: #{tpu_custom_call.1} parent=1 // pred_region
      %2105 = dma.done [#allocation4], 256
    $region41: #{tpu_custom_call.1} parent=1 // pred_fallthru
      _
    %2106 = vsyncpa [#allocation3], 1
    %2107 = vsyncpa [#allocation6], 1
    %2108 = vsyncpa [#allocation4], 1

</llo_original>
